<compile_context>
chip_gen: v7x
topology: tpu7x:2x2x1
jax: 0.10.0
libtpu: 0.0.40
codegen_flags: <defaults>
</compile_context>

<pallas_src>
import numpy as np
import jax
import jax.numpy as jnp
from jax.experimental import pallas as pl
from jax.experimental.pallas import tpu as pltpu

# -------------------- synthetic model sizes (small, consistent with SMPL) ----
B = 2                    # batch
V = 512                  # mesh vertices (real SMPL: 6890)
NJ = 24                  # internal SMPL joints: 1 global + 23 body
NBETAS = 10              # shape parameters
NPOSE = (NJ - 1) * 9     # 207 pose-blendshape features
NFEAT = NBETAS + NPOSE   # combined blendshape features
K = 17                   # external joints_regressor output joints
TILE_V = 256             # vertex lane-tile; sweep to 1024-2048 for real SMPL sizes


# ------------------------- Kernel A: combined blendshapes ---------------------
def _blend_kernel(feat_ref, dirs_ref, vt_ref, out_ref):
    """v_posed[b, c, v] = v_template[c, v] + sum_f feat[b, f] * dirs[c, f, v].

    feat = [betas | pose_feature] (shape + pose blendshapes in one matmul).
    Planar layout keeps the vertex axis on lanes -> lane-dense MXU N and
    unmasked full-lane stores.
    """
    feat = feat_ref[...]                          # [B, NFEAT]   bf16
    vt = vt_ref[...]                              # [3, tile_v]  f32
    for c in range(3):                            # static unrolled xyz planes
        d = dirs_ref[c]                           # [NFEAT, tile_v] bf16
        val = vt[c:c + 1, :] + jnp.dot(feat, d, preferred_element_type=jnp.float32)
        out_ref[:, c:c + 1, :] = val[:, None, :]  # [B, 1, tile_v]


def blend_vertices(feat, dirs_pf, v_template_pf, tile_v=TILE_V):
    bsz, nfeat = feat.shape
    vp = dirs_pf.shape[2]                          # padded vertex count
    grid = (vp // tile_v,)                         # exact: vp padded at init
    return pl.pallas_call(
        _blend_kernel,
        out_shape=jax.ShapeDtypeStruct((bsz, 3, vp), jnp.float32),
        grid_spec=pltpu.PrefetchScalarGridSpec(
            num_scalar_prefetch=0,
            grid=grid,
            in_specs=[
                pl.BlockSpec((bsz, nfeat), lambda t: (0, 0)),
                pl.BlockSpec((3, nfeat, tile_v), lambda t: (0, 0, t)),
                pl.BlockSpec((3, tile_v), lambda t: (0, t)),
            ],
            out_specs=pl.BlockSpec((bsz, 3, tile_v), lambda t: (0, 0, t))),
        compiler_params=pltpu.CompilerParams(
            dimension_semantics=("parallel",)),
    )(feat, dirs_pf, v_template_pf)


# ---------------- Kernel B: LBS skinning + fused external joint regression ----
def _skin_kernel(vp_ref, wt_ref, at_ref, jreg_ref, vout_ref, jout_ref):
    t = pl.program_id(1)
    # blended per-vertex transform, transposed: [16, NJ] @ [NJ, tile_v]
    Tt = jnp.dot(at_ref[0], wt_ref[...].astype(jnp.float32),
                 preferred_element_type=jnp.float32)           # [16, tile_v]
    vp = vp_ref[0]                                             # [3, tile_v]
    x, y, z = vp[0:1], vp[1:2], vp[2:3]
    ox = Tt[0:1] * x + Tt[1:2] * y + Tt[2:3] * z + Tt[3:4]
    oy = Tt[4:5] * x + Tt[5:6] * y + Tt[6:7] * z + Tt[7:8]
    oz = Tt[8:9] * x + Tt[9:10] * y + Tt[10:11] * z + Tt[11:12]
    verts = jnp.concatenate([ox, oy, oz], axis=0)              # [3, tile_v]
    vout_ref[0] = verts                                        # lane-dense store

    # fused external joints regression, accumulated across vertex tiles
    contrib = jnp.dot(verts, jreg_ref[...].astype(jnp.float32),
                      preferred_element_type=jnp.float32)      # [3, K]

    @pl.when(t == 0)
    def _():
        jout_ref[...] = jnp.zeros_like(jout_ref)

    jout_ref[...] += contrib[None]


def skin_and_regress(v_posed_p, lbs_weights_T, A_T, joints_reg_T, tile_v=TILE_V):
    bsz, _, vp = v_posed_p.shape
    nj = lbs_weights_T.shape[0]
    k = joints_reg_T.shape[1]
    grid = (bsz, vp // tile_v)
    return pl.pallas_call(
        _skin_kernel,
        out_shape=(jax.ShapeDtypeStruct((bsz, 3, vp), jnp.float32),
                   jax.ShapeDtypeStruct((bsz, 3, k), jnp.float32)),
        grid_spec=pltpu.PrefetchScalarGridSpec(
            num_scalar_prefetch=0,
            grid=grid,
            in_specs=[
                pl.BlockSpec((1, 3, tile_v), lambda b, t: (b, 0, t)),
                pl.BlockSpec((nj, tile_v), lambda b, t: (0, t)),
                pl.BlockSpec((1, 16, nj), lambda b, t: (b, 0, 0)),
                pl.BlockSpec((tile_v, k), lambda b, t: (t, 0)),
            ],
            out_specs=[pl.BlockSpec((1, 3, tile_v), lambda b, t: (b, 0, t)),
                       pl.BlockSpec((1, 3, k), lambda b, t: (b, 0, 0))]),
        compiler_params=pltpu.CompilerParams(
            dimension_semantics=("parallel", "arbitrary")),
    )(v_posed_p, lbs_weights_T, A_T, joints_reg_T)


# ------------------------------ JAX glue (tiny per-joint math) -----------------
def batch_rodrigues(rot_vecs, eps=1e-8):
    """Axis-angle -> rotation matrices, matching smplx.batch_rodrigues."""
    n = rot_vecs.shape[0]
    angle = jnp.linalg.norm(rot_vecs + eps, axis=1, keepdims=True)      # [N,1]
    rot_dir = rot_vecs / angle
    cos = jnp.cos(angle)[:, None, :]                                     # [N,1,1]
    sin = jnp.sin(angle)[:, None, :]
    rx, ry, rz = jnp.split(rot_dir, 3, axis=1)
    zeros = jnp.zeros((n, 1), dtype=rot_vecs.dtype)
    Kmat = jnp.concatenate(
        [zeros, -rz, ry, rz, zeros, -rx, -ry, rx, zeros], axis=1
    ).reshape(n, 3, 3)
    ident = jnp.eye(3, dtype=rot_vecs.dtype)[None]
    return ident + sin * Kmat + (1.0 - cos) * jnp.matmul(Kmat, Kmat)


def batch_rigid_transform(rot_mats, joints, parents, levels):
    """Forward kinematics, matching smplx.batch_rigid_transform, but with one
    batched 4x4 matmul per tree depth instead of 23 sequential matmuls."""
    bsz, nj = rot_mats.shape[0], rot_mats.shape[1]
    joints = joints[..., None]                                           # [B,J,3,1]
    rel_joints = joints.at[:, 1:].add(-joints[:, parents[1:]])
    top = jnp.concatenate([rot_mats, rel_joints], axis=-1)               # [B,J,3,4]
    bottom = jnp.broadcast_to(
        jnp.array([0.0, 0.0, 0.0, 1.0], dtype=rot_mats.dtype), (bsz, nj, 1, 4))
    local = jnp.concatenate([top, bottom], axis=-2)                      # [B,J,4,4]

    transforms = local                      # root is already absolute
    for idx in levels:                      # depth-ordered levels (static numpy)
        par = parents[idx]
        transforms = transforms.at[:, idx].set(
            jnp.matmul(transforms[:, par], local[:, idx]))

    posed_joints = transforms[:, :, :3, 3]
    joints_homo = jnp.concatenate(
        [joints, jnp.zeros_like(joints[:, :, :1])], axis=2)              # [B,J,4,1]
    rel = transforms - jnp.pad(jnp.matmul(transforms, joints_homo),
                               ((0, 0), (0, 0), (0, 0), (3, 0)))
    return posed_joints, rel


# ------------------------------ SMPL module ------------------------------------
class SMPLPallas:
    """SMPL forward (LBS) with Pallas kernels on the per-vertex hot path.

    Synthetic deterministic parameters stand in for the smplx checkpoint.
    Neutral / male / female models share the same synthetic parameters.
    """

    def __init__(self, key, tile_v=TILE_V):
        ks = jax.random.split(key, 6)
        v_template = 0.1 * jax.random.normal(ks[0], (V, 3), jnp.float32)
        shapedirs = 0.01 * jax.random.normal(ks[1], (V, 3, NBETAS), jnp.float32)
        posedirs = 0.001 * jax.random.normal(ks[2], (NPOSE, V, 3), jnp.float32)
        J_regressor = jax.nn.softmax(
            jax.random.normal(ks[3], (NJ, V)), axis=-1).astype(jnp.float32)
        lbs_weights = jax.nn.softmax(
            4.0 * jax.random.normal(ks[4], (V, NJ)), axis=-1).astype(jnp.float32)
        joints_regressor = jax.nn.softmax(
            jax.random.normal(ks[5], (K, V)), axis=-1).astype(jnp.float32)

        # synthetic kinematic tree + its depth levels (static, computed once)
        self.parents = np.array([-1] + [(i - 1) // 3 for i in range(1, NJ)],
                                dtype=np.int32)
        depth = np.zeros(NJ, dtype=np.int32)
        for i in range(1, NJ):
            depth[i] = depth[self.parents[i]] + 1
        self.levels = [np.where(depth == d)[0] for d in range(1, int(depth.max()) + 1)]

        # Exact algebraic fold of J = J_regressor @ v_shaped (both linear in betas):
        #   J(betas) = J_regressor @ v_template + einsum('bl,ljc->bjc', betas, J_dirs)
        # so v_shaped never has to be materialised or round-tripped through HBM.
        self.J_template = jnp.matmul(J_regressor, v_template)                 # [NJ,3]
        self.J_dirs = jnp.einsum('jv,vcl->ljc', J_regressor, shapedirs)       # [10,NJ,3]

        # Planar (xyz-plane-first) layouts, vertex axis last (lane axis), padded
        # to a multiple of tile_v; static weights in bf16 to halve HBM bytes.
        self.tile_v = tile_v
        vpad = (-V) % tile_v
        self.vp = V + vpad

        sd_pf = jnp.transpose(shapedirs, (1, 2, 0))            # [3, NBETAS, V]
        pd_pf = jnp.transpose(posedirs, (2, 0, 1))             # [3, NPOSE, V]
        dirs_pf = jnp.concatenate([sd_pf, pd_pf], axis=1)      # [3, NFEAT, V]
        self.dirs_pf = jnp.pad(
            dirs_pf, ((0, 0), (0, 0), (0, vpad))).astype(jnp.bfloat16)
        self.v_template_pf = jnp.pad(v_template.T, ((0, 0), (0, vpad)))        # [3,Vp] f32
        self.lbs_weights_T = jnp.pad(
            lbs_weights.T, ((0, 0), (0, vpad))).astype(jnp.bfloat16)           # [NJ,Vp]
        self.joints_regressor_T = jnp.pad(
            joints_regressor.T, ((0, vpad), (0, 0))).astype(jnp.bfloat16)      # [Vp,K]

        self.num_verts = V
        self.num_joints = K
        self._forward_jit = jax.jit(self._forward_impl)

    # ---------------------------- jitted core ---------------------------------
    def _forward_impl(self, betas, body_pose, global_orient, transl):
        batch_size = betas.shape[0]
        pose2rot = (body_pose.ndim == 2)
        if pose2rot:
            full_pose = jnp.concatenate([global_orient, body_pose], axis=1)  # [B,72]
            rot_mats = batch_rodrigues(
                full_pose.reshape(-1, 3).astype(jnp.float32)
            ).reshape(batch_size, NJ, 3, 3)
        else:
            rot_mats = jnp.concatenate(
                [global_orient.reshape(batch_size, 1, 3, 3),
                 body_pose.reshape(batch_size, NJ - 1, 3, 3)], axis=1
            ).astype(jnp.float32)

        ident = jnp.eye(3, dtype=jnp.float32)
        pose_feature = (rot_mats[:, 1:] - ident).reshape(batch_size, NPOSE)

        # Kernel A: combined shape+pose blendshapes -> planar v_posed [B,3,Vp]
        feat = jnp.concatenate(
            [betas.astype(jnp.float32), pose_feature], axis=1).astype(jnp.bfloat16)
        v_posed_p = blend_vertices(feat, self.dirs_pf, self.v_template_pf,
                                   self.tile_v)

        # internal SMPL joints from betas (exact precomposed J_regressor fold)
        J = self.J_template[None] + jnp.einsum(
            'bl,ljc->bjc', betas.astype(jnp.float32), self.J_dirs)           # [B,NJ,3]

        # tiny 24-joint kinematic chain (level-parallel batched 4x4 matmuls)
        _, A = batch_rigid_transform(rot_mats, J, self.parents, self.levels)  # [B,NJ,4,4]

        # transposed flattened transforms [B,16,NJ]; fold transl into translation
        # rows (lbs weights sum to 1, so the blend adds exactly transl).
        A_T = jnp.swapaxes(A.reshape(batch_size, NJ, 16), 1, 2)
        A_T = A_T.at[:, jnp.array([3, 7, 11]), :].add(
            transl.astype(jnp.float32)[:, :, None])

        # Kernel B: LBS skinning + fused external joints regression
        verts_p, joints_p = skin_and_regress(
            v_posed_p, self.lbs_weights_T, A_T, self.joints_regressor_T,
            self.tile_v)

        vertices = jnp.transpose(verts_p[:, :, :self.num_verts], (0, 2, 1))  # [B,V,3]
        joints = jnp.transpose(joints_p, (0, 2, 1))                          # [B,K,3]
        return {"vertices": vertices, "joints": joints}

    # ---------------------------- public forward ------------------------------
    def forward(self, betas, body_pose, global_orient, transl=None, gender=None):
        batch_size = betas.shape[0]
        if batch_size == 0:
            return {"vertices": jnp.zeros((0, self.num_verts, 3), jnp.float32),
                    "joints": jnp.zeros((0, self.num_joints, 3), jnp.float32)}
        # TODO(synk): torch's gender path uses data-dependent boolean-mask batching
        # over three gender-specific models; the synthetic gender models share
        # parameters, so the neutral path below is exact for any gender input.
        if transl is None:
            transl = jnp.zeros((batch_size, 3), jnp.float32)
        return self._forward_jit(betas, body_pose, global_orient, transl)


# ------------------------------ main --------------------------------------------
if __name__ == "__main__":
    model = SMPLPallas(jax.random.PRNGKey(0))

    kb, kp, kg, kt = jax.random.split(jax.random.PRNGKey(0), 4)
    betas = 0.5 * jax.random.normal(kb, (B, NBETAS), jnp.float32)
    body_pose = 0.2 * jax.random.normal(kp, (B, (NJ - 1) * 3), jnp.float32)
    global_orient = 0.2 * jax.random.normal(kg, (B, 3), jnp.float32)
    transl = 0.1 * jax.random.normal(kt, (B, 3), jnp.float32)

    out = model.forward(betas, body_pose, global_orient, transl=transl)
    jax.block_until_ready(out["vertices"])
    jax.block_until_ready(out["joints"])

    assert out["vertices"].shape == (B, V, 3)
    assert out["joints"].shape == (B, K, 3)
    assert bool(jnp.all(jnp.isfinite(out["vertices"])))
    assert bool(jnp.all(jnp.isfinite(out["joints"])))
    print("KERNEL_OK")
</pallas_src>

<mosaic_0001>
module attributes {stable_mosaic.version = 11 : i64} {
  func.func @_blend_kernel(%arg0: i32, %arg1: memref<2x217xbf16, #tpu.memory_space<vmem>>, %arg2: memref<3x217x256xbf16, #tpu.memory_space<vmem>>, %arg3: memref<3x256xf32, #tpu.memory_space<vmem>>, %arg4: memref<2x3x256xf32, #tpu.memory_space<vmem>>) attributes {dimension_semantics = [#tpu.dimension_semantics<parallel>], iteration_bounds = array<i64: 2>, scalar_prefetch = 0 : i64, scratch_operands = 0 : i64, tpu.core_type = #tpu.core_type<tc>, window_params = [{pipeline_mode = #tpu.pipeline_mode<synchronous>, transform_indices = @transform_0, window_bounds = array<i64: 2, 217>}, {transform_indices = @transform_1, window_bounds = array<i64: 3, 217, 256>}, {transform_indices = @transform_2, window_bounds = array<i64: 3, 256>}, {transform_indices = @transform_3, window_bounds = array<i64: 2, 3, 256>}]} {
    %c0 = arith.constant 0 : index
    %c0_0 = arith.constant 0 : index
    %0 = vector.load %arg1[%c0, %c0_0] : memref<2x217xbf16, #tpu.memory_space<vmem>>, vector<2x217xbf16>
    %c0_1 = arith.constant 0 : index
    %c0_2 = arith.constant 0 : index
    %1 = vector.load %arg3[%c0_1, %c0_2] : memref<3x256xf32, #tpu.memory_space<vmem>>, vector<3x256xf32>
    %c0_3 = arith.constant 0 : index
    %c0_4 = arith.constant 0 : index
    %c0_5 = arith.constant 0 : index
    %2 = vector.load %arg2[%c0_3, %c0_4, %c0_5] : memref<3x217x256xbf16, #tpu.memory_space<vmem>>, vector<1x217x256xbf16>
    %3 = vector.shape_cast %2 : vector<1x217x256xbf16> to vector<217x256xbf16>
    %4 = vector.extract_strided_slice %1 {offsets = [0, 0], sizes = [1, 256], strides = [1, 1]} : vector<3x256xf32> to vector<1x256xf32>
    %cst = arith.constant dense<0.000000e+00> : vector<2x256xf32>
    %5 = tpu.matmul %0, %3, %cst {dimension_numbers = #tpu.dot_dimension_numbers<[1], [0], [0], [1], [0, 0, 1, 1], [], []>} : vector<2x217xbf16>, vector<217x256xbf16>, vector<2x256xf32> -> vector<2x256xf32>
    %6 = vector.broadcast %4 : vector<1x256xf32> to vector<2x256xf32>
    %7 = arith.addf %6, %5 : vector<2x256xf32>
    %8 = vector.shape_cast %7 : vector<2x256xf32> to vector<2x1x256xf32>
    %c0_6 = arith.constant 0 : index
    %c0_7 = arith.constant 0 : index
    %c0_8 = arith.constant 0 : index
    %9 = vector.load %arg4[%c0_6, %c0_7, %c0_8] : memref<2x3x256xf32, #tpu.memory_space<vmem>>, vector<2x1x256xf32>
    tpu.vector_store %arg4[%c0_6, %c0_7, %c0_8], %8 {strides = array<i32>} : memref<2x3x256xf32, #tpu.memory_space<vmem>>, vector<2x1x256xf32>,
    %c1 = arith.constant 1 : index
    %c0_9 = arith.constant 0 : index
    %c0_10 = arith.constant 0 : index
    %10 = vector.load %arg2[%c1, %c0_9, %c0_10] : memref<3x217x256xbf16, #tpu.memory_space<vmem>>, vector<1x217x256xbf16>
    %11 = vector.shape_cast %10 : vector<1x217x256xbf16> to vector<217x256xbf16>
    %12 = vector.extract_strided_slice %1 {offsets = [1, 0], sizes = [1, 256], strides = [1, 1]} : vector<3x256xf32> to vector<1x256xf32>
    %cst_11 = arith.constant dense<0.000000e+00> : vector<2x256xf32>
    %13 = tpu.matmul %0, %11, %cst_11 {dimension_numbers = #tpu.dot_dimension_numbers<[1], [0], [0], [1], [0, 0, 1, 1], [], []>} : vector<2x217xbf16>, vector<217x256xbf16>, vector<2x256xf32> -> vector<2x256xf32>
    %14 = vector.broadcast %12 : vector<1x256xf32> to vector<2x256xf32>
    %15 = arith.addf %14, %13 : vector<2x256xf32>
    %16 = vector.shape_cast %15 : vector<2x256xf32> to vector<2x1x256xf32>
    %c0_12 = arith.constant 0 : index
    %c1_13 = arith.constant 1 : index
    %c0_14 = arith.constant 0 : index
    %17 = vector.load %arg4[%c0_12, %c1_13, %c0_14] : memref<2x3x256xf32, #tpu.memory_space<vmem>>, vector<2x1x256xf32>
    tpu.vector_store %arg4[%c0_12, %c1_13, %c0_14], %16 {strides = array<i32>} : memref<2x3x256xf32, #tpu.memory_space<vmem>>, vector<2x1x256xf32>,
    %c2 = arith.constant 2 : index
    %c0_15 = arith.constant 0 : index
    %c0_16 = arith.constant 0 : index
    %18 = vector.load %arg2[%c2, %c0_15, %c0_16] : memref<3x217x256xbf16, #tpu.memory_space<vmem>>, vector<1x217x256xbf16>
    %19 = vector.shape_cast %18 : vector<1x217x256xbf16> to vector<217x256xbf16>
    %20 = vector.extract_strided_slice %1 {offsets = [2, 0], sizes = [1, 256], strides = [1, 1]} : vector<3x256xf32> to vector<1x256xf32>
    %cst_17 = arith.constant dense<0.000000e+00> : vector<2x256xf32>
    %21 = tpu.matmul %0, %19, %cst_17 {dimension_numbers = #tpu.dot_dimension_numbers<[1], [0], [0], [1], [0, 0, 1, 1], [], []>} : vector<2x217xbf16>, vector<217x256xbf16>, vector<2x256xf32> -> vector<2x256xf32>
    %22 = vector.broadcast %20 : vector<1x256xf32> to vector<2x256xf32>
    %23 = arith.addf %22, %21 : vector<2x256xf32>
    %24 = vector.shape_cast %23 : vector<2x256xf32> to vector<2x1x256xf32>
    %c0_18 = arith.constant 0 : index
    %c2_19 = arith.constant 2 : index
    %c0_20 = arith.constant 0 : index
    %25 = vector.load %arg4[%c0_18, %c2_19, %c0_20] : memref<2x3x256xf32, #tpu.memory_space<vmem>>, vector<2x1x256xf32>
    tpu.vector_store %arg4[%c0_18, %c2_19, %c0_20], %24 {strides = array<i32>} : memref<2x3x256xf32, #tpu.memory_space<vmem>>, vector<2x1x256xf32>,
    return
  }
  func.func @transform_0(%arg0: i32) -> (i32, i32) {
    %c0_i32 = arith.constant 0 : i32
    %c0_i32_0 = arith.constant 0 : i32
    %c0_i32_1 = arith.constant 0 : i32
    return %c0_i32, %c0_i32_0 : i32, i32
  }
  func.func @transform_1(%arg0: i32) -> (i32, i32, i32) {
    %c0_i32 = arith.constant 0 : i32
    %c0_i32_0 = arith.constant 0 : i32
    %c0_i32_1 = arith.constant 0 : i32
    return %c0_i32, %c0_i32_0, %arg0 : i32, i32, i32
  }
  func.func @transform_2(%arg0: i32) -> (i32, i32) {
    %c0_i32 = arith.constant 0 : i32
    %c0_i32_0 = arith.constant 0 : i32
    return %c0_i32, %arg0 : i32, i32
  }
  func.func @transform_3(%arg0: i32) -> (i32, i32, i32) {
    %c0_i32 = arith.constant 0 : i32
    %c0_i32_0 = arith.constant 0 : i32
    %c0_i32_1 = arith.constant 0 : i32
    return %c0_i32, %c0_i32_0, %arg0 : i32, i32, i32
  }
}

module attributes {stable_mosaic.version = 11 : i64} {
  func.func @_skin_kernel(%arg0: i32, %arg1: i32, %arg2: memref<1x3x256xf32, #tpu.memory_space<vmem>>, %arg3: memref<24x256xbf16, #tpu.memory_space<vmem>>, %arg4: memref<1x16x24xf32, #tpu.memory_space<vmem>>, %arg5: memref<256x17xbf16, #tpu.memory_space<vmem>>, %arg6: memref<1x3x256xf32, #tpu.memory_space<vmem>>, %arg7: memref<1x3x17xf32, #tpu.memory_space<vmem>>) attributes {dimension_semantics = [#tpu.dimension_semantics<parallel>, #tpu.dimension_semantics<arbitrary>], iteration_bounds = array<i64: 2, 2>, scalar_prefetch = 0 : i64, scratch_operands = 0 : i64, tpu.core_type = #tpu.core_type<tc>, window_params = [{transform_indices = @transform_0, window_bounds = array<i64: 1, 3, 256>}, {transform_indices = @transform_1, window_bounds = array<i64: 24, 256>}, {transform_indices = @transform_2, window_bounds = array<i64: 1, 16, 24>}, {transform_indices = @transform_3, window_bounds = array<i64: 256, 17>}, {transform_indices = @transform_4, window_bounds = array<i64: 1, 3, 256>}, {transform_indices = @transform_5, window_bounds = array<i64: 1, 3, 17>}]} {
    %c0 = arith.constant 0 : index
    %c0_0 = arith.constant 0 : index
    %c0_1 = arith.constant 0 : index
    %0 = vector.load %arg4[%c0, %c0_0, %c0_1] : memref<1x16x24xf32, #tpu.memory_space<vmem>>, vector<1x16x24xf32>
    %1 = vector.shape_cast %0 : vector<1x16x24xf32> to vector<16x24xf32>
    %c0_2 = arith.constant 0 : index
    %c0_3 = arith.constant 0 : index
    %2 = vector.load %arg3[%c0_2, %c0_3] : memref<24x256xbf16, #tpu.memory_space<vmem>>, vector<24x256xbf16>
    %3 = arith.extf %2 : vector<24x256xbf16> to vector<24x256xf32>
    %cst = arith.constant dense<0.000000e+00> : vector<16x256xf32>
    %4 = tpu.matmul %1, %3, %cst {dimension_numbers = #tpu.dot_dimension_numbers<[1], [0], [0], [1], [0, 0, 1, 1], [], []>} : vector<16x24xf32>, vector<24x256xf32>, vector<16x256xf32> -> vector<16x256xf32>
    %c0_4 = arith.constant 0 : index
    %c0_5 = arith.constant 0 : index
    %c0_6 = arith.constant 0 : index
    %5 = vector.load %arg2[%c0_4, %c0_5, %c0_6] : memref<1x3x256xf32, #tpu.memory_space<vmem>>, vector<1x3x256xf32>
    %6 = vector.shape_cast %5 : vector<1x3x256xf32> to vector<3x256xf32>
    %7 = vector.extract_strided_slice %6 {offsets = [0, 0], sizes = [1, 256], strides = [1, 1]} : vector<3x256xf32> to vector<1x256xf32>
    %8 = vector.extract_strided_slice %6 {offsets = [1, 0], sizes = [1, 256], strides = [1, 1]} : vector<3x256xf32> to vector<1x256xf32>
    %9 = vector.extract_strided_slice %6 {offsets = [2, 0], sizes = [1, 256], strides = [1, 1]} : vector<3x256xf32> to vector<1x256xf32>
    %10 = vector.extract_strided_slice %4 {offsets = [0, 0], sizes = [1, 256], strides = [1, 1]} : vector<16x256xf32> to vector<1x256xf32>
    %11 = arith.mulf %10, %7 : vector<1x256xf32>
    %12 = vector.extract_strided_slice %4 {offsets = [1, 0], sizes = [1, 256], strides = [1, 1]} : vector<16x256xf32> to vector<1x256xf32>
    %13 = arith.mulf %12, %8 : vector<1x256xf32>
    %14 = arith.addf %11, %13 : vector<1x256xf32>
    %15 = vector.extract_strided_slice %4 {offsets = [2, 0], sizes = [1, 256], strides = [1, 1]} : vector<16x256xf32> to vector<1x256xf32>
    %16 = arith.mulf %15, %9 : vector<1x256xf32>
    %17 = arith.addf %14, %16 : vector<1x256xf32>
    %18 = vector.extract_strided_slice %4 {offsets = [3, 0], sizes = [1, 256], strides = [1, 1]} : vector<16x256xf32> to vector<1x256xf32>
    %19 = arith.addf %17, %18 : vector<1x256xf32>
    %20 = vector.extract_strided_slice %4 {offsets = [4, 0], sizes = [1, 256], strides = [1, 1]} : vector<16x256xf32> to vector<1x256xf32>
    %21 = arith.mulf %20, %7 : vector<1x256xf32>
    %22 = vector.extract_strided_slice %4 {offsets = [5, 0], sizes = [1, 256], strides = [1, 1]} : vector<16x256xf32> to vector<1x256xf32>
    %23 = arith.mulf %22, %8 : vector<1x256xf32>
    %24 = arith.addf %21, %23 : vector<1x256xf32>
    %25 = vector.extract_strided_slice %4 {offsets = [6, 0], sizes = [1, 256], strides = [1, 1]} : vector<16x256xf32> to vector<1x256xf32>
    %26 = arith.mulf %25, %9 : vector<1x256xf32>
    %27 = arith.addf %24, %26 : vector<1x256xf32>
    %28 = vector.extract_strided_slice %4 {offsets = [7, 0], sizes = [1, 256], strides = [1, 1]} : vector<16x256xf32> to vector<1x256xf32>
    %29 = arith.addf %27, %28 : vector<1x256xf32>
    %30 = vector.extract_strided_slice %4 {offsets = [8, 0], sizes = [1, 256], strides = [1, 1]} : vector<16x256xf32> to vector<1x256xf32>
    %31 = arith.mulf %30, %7 : vector<1x256xf32>
    %32 = vector.extract_strided_slice %4 {offsets = [9, 0], sizes = [1, 256], strides = [1, 1]} : vector<16x256xf32> to vector<1x256xf32>
    %33 = arith.mulf %32, %8 : vector<1x256xf32>
    %34 = arith.addf %31, %33 : vector<1x256xf32>
    %35 = vector.extract_strided_slice %4 {offsets = [10, 0], sizes = [1, 256], strides = [1, 1]} : vector<16x256xf32> to vector<1x256xf32>
    %36 = arith.mulf %35, %9 : vector<1x256xf32>
    %37 = arith.addf %34, %36 : vector<1x256xf32>
    %38 = vector.extract_strided_slice %4 {offsets = [11, 0], sizes = [1, 256], strides = [1, 1]} : vector<16x256xf32> to vector<1x256xf32>
    %39 = arith.addf %37, %38 : vector<1x256xf32>
    %40 = tpu.concatenate %19, %29, %39 in 0 : vector<1x256xf32>, vector<1x256xf32>, vector<1x256xf32> -> vector<3x256xf32>
    %c0_7 = arith.constant 0 : index
    %c0_8 = arith.constant 0 : index
    %c0_9 = arith.constant 0 : index
    %41 = vector.load %arg6[%c0_7, %c0_8, %c0_9] : memref<1x3x256xf32, #tpu.memory_space<vmem>>, vector<1x3x256xf32>
    %42 = vector.shape_cast %41 : vector<1x3x256xf32> to vector<3x256xf32>
    %43 = vector.shape_cast %40 : vector<3x256xf32> to vector<1x3x256xf32>
    tpu.vector_store %arg6[%c0_7, %c0_8, %c0_9], %43 {strides = array<i32>} : memref<1x3x256xf32, #tpu.memory_space<vmem>>, vector<1x3x256xf32>,
    %c0_10 = arith.constant 0 : index
    %c0_11 = arith.constant 0 : index
    %44 = vector.load %arg5[%c0_10, %c0_11] : memref<256x17xbf16, #tpu.memory_space<vmem>>, vector<256x17xbf16>
    %45 = arith.extf %44 : vector<256x17xbf16> to vector<256x17xf32>
    %cst_12 = arith.constant dense<0.000000e+00> : vector<3x17xf32>
    %46 = tpu.matmul %40, %45, %cst_12 {dimension_numbers = #tpu.dot_dimension_numbers<[1], [0], [0], [1], [0, 0, 1, 1], [], []>} : vector<3x256xf32>, vector<256x17xf32>, vector<3x17xf32> -> vector<3x17xf32>
    %c0_i32 = arith.constant 0 : i32
    %47 = arith.cmpi eq, %arg1, %c0_i32 : i32
    %48 = arith.extui %47 : i1 to i32
    %c0_i32_13 = arith.constant 0 : i32
    %49 = arith.cmpi ne, %48, %c0_i32_13 : i32
    scf.if %49 {
      %cst_20 = arith.constant 0.000000e+00 : f32
      %54 = vector.broadcast %cst_20 : f32 to vector<1x3x17xf32>
      %c0_21 = arith.constant 0 : index
      %c0_22 = arith.constant 0 : index
      %c0_23 = arith.constant 0 : index
      %55 = vector.load %arg7[%c0_21, %c0_22, %c0_23] : memref<1x3x17xf32, #tpu.memory_space<vmem>>, vector<1x3x17xf32>
      tpu.vector_store %arg7[%c0_21, %c0_22, %c0_23], %54 {strides = array<i32>} : memref<1x3x17xf32, #tpu.memory_space<vmem>>, vector<1x3x17xf32>,
    } else {
    }
    %c0_14 = arith.constant 0 : index
    %c0_15 = arith.constant 0 : index
    %c0_16 = arith.constant 0 : index
    %50 = vector.load %arg7[%c0_14, %c0_15, %c0_16] : memref<1x3x17xf32, #tpu.memory_space<vmem>>, vector<1x3x17xf32>
    %51 = vector.shape_cast %46 : vector<3x17xf32> to vector<1x3x17xf32>
    %52 = arith.addf %50, %51 : vector<1x3x17xf32>
    %c0_17 = arith.constant 0 : index
    %c0_18 = arith.constant 0 : index
    %c0_19 = arith.constant 0 : index
    %53 = vector.load %arg7[%c0_17, %c0_18, %c0_19] : memref<1x3x17xf32, #tpu.memory_space<vmem>>, vector<1x3x17xf32>
    tpu.vector_store %arg7[%c0_17, %c0_18, %c0_19], %52 {strides = array<i32>} : memref<1x3x17xf32, #tpu.memory_space<vmem>>, vector<1x3x17xf32>,
    return
  }
  func.func @transform_0(%arg0: i32, %arg1: i32) -> (i32, i32, i32) {
    %c0_i32 = arith.constant 0 : i32
    %c0_i32_0 = arith.constant 0 : i32
    return %arg0, %c0_i32, %arg1 : i32, i32, i32
  }
  func.func @transform_1(%arg0: i32, %arg1: i32) -> (i32, i32) {
    %c0_i32 = arith.constant 0 : i32
    %c0_i32_0 = arith.constant 0 : i32
    return %c0_i32, %arg1 : i32, i32
  }
  func.func @transform_2(%arg0: i32, %arg1: i32) -> (i32, i32, i32) {
    %c0_i32 = arith.constant 0 : i32
    %c0_i32_0 = arith.constant 0 : i32
    %c0_i32_1 = arith.constant 0 : i32
    return %arg0, %c0_i32, %c0_i32_0 : i32, i32, i32
  }
  func.func @transform_3(%arg0: i32, %arg1: i32) -> (i32, i32) {
    %c0_i32 = arith.constant 0 : i32
    %c0_i32_0 = arith.constant 0 : i32
    return %arg1, %c0_i32 : i32, i32
  }
  func.func @transform_4(%arg0: i32, %arg1: i32) -> (i32, i32, i32) {
    %c0_i32 = arith.constant 0 : i32
    %c0_i32_0 = arith.constant 0 : i32
    return %arg0, %c0_i32, %arg1 : i32, i32, i32
  }
  func.func @transform_5(%arg0: i32, %arg1: i32) -> (i32, i32, i32) {
    %c0_i32 = arith.constant 0 : i32
    %c0_i32_0 = arith.constant 0 : i32
    %c0_i32_1 = arith.constant 0 : i32
    return %arg0, %c0_i32, %c0_i32_0 : i32, i32, i32
  }
}

</mosaic_0001>

<llo_original>
// kernel: _forward_impl.2
$region0: #{_forward_impl.2}
  #allocation0 [shape = 'u32[]', space=smem, size = 0x4, offset = 0x4, fixed_abs, tag = 'smem constant byte address 0x4 - core index']
  #allocation1 [shape = 'u32[144,128]{1,0:T(1,128)}', space=vmem, size = 0x12000, scoped, tag = 'internal scratch']
  %s0 = inlined_call_operand.vmem [shape: bf16[2,217], index: 0, kind: input, shape index: {}]
  %s1 = inlined_call_operand.vmem [shape: bf16[3,217,512], index: 1, kind: input, shape index: {}]
  %s2 = inlined_call_operand.vmem [shape: f32[3,512], index: 2, kind: input, shape index: {}]
  %s3 = inlined_call_operand.vmem [shape: f32[2,3,512], index: 3, kind: output, shape index: {}]
  %s4 = sld [smem:[#allocation0]]
  $region117: #{_forward_impl.2} parent=0
    _
  %s6 = ssub.s32 1, %s4
  %s7 = scalar_select 0, %s6, %s4
  $region1: #{_forward_impl.2} parent=0
    #allocation2 [shape = 'u8[688128]{0}', space=vmem, size = 0xa8000, scoped, tag = 'input window, operand 1']
    #allocation3 [shape = 'u8[16384]{0}', space=vmem, size = 0x4000, scoped, tag = 'output window, operand 0']
    loop: start=0, step=1, limit=4
    $region2: #{_forward_impl.2} parent=1 // loop_pre_header
      _
    $region3: #{_forward_impl.2} parent=1 // loop_header
      %s9 = sphi 0, %s13
      %p10 = scmp.ge.s32.totalorder %s9, 4
      %s17 = sphi 0, %s17
      %s19 = sphi 0, %s17
      %s20 = sphi 0, %s19
      %s34 = sphi 0, %s20
      %s40 = sphi 0, %s42
      %s43 = sphi 0, %s40
      %s44 = sphi 0, %s43
      %s60 = sphi 0, %s44
      %s66 = sphi 0, %s68
      %s69 = sphi 0, %s66
      %s70 = sphi 0, %s69
      %s86 = sphi 0, %s70
      %s92 = sphi 0, %s94
      %s95 = sphi 0, %s92
      %s96 = sphi 0, %s95
      %s112 = sphi 0, %s96
    $region4: #{_forward_impl.2} parent=1 // loop_header_branch
      %12 = sbr.rel (%p10) target = $region8
    $region5: #{_forward_impl.2} parent=1 // loop_body
      %s14 = ssub.s32 %s9, 1
      %s15 = ssub.s32 %s9, 2
      %s16 = sadd.s32 %s9, 1
      %s18 = sadd.s32 %s17, 1
      %p21 = scmp.eq.s32.totalorder %s9, 1
      %p22 = scmp.ne.s32.totalorder %s17, %s19
      %p23 = scmp.eq.s32.totalorder %s9, 0
      %p24 = por %p22, %p23
      %p25 = scmp.ne.s32.totalorder %s17, %s19
      %p26 = scmp.eq.s32.totalorder %s14, 1
      %p27 = por %p25, %p26
      %p28 = scmp.ne.s32.totalorder %s19, %s20
      %p29 = scmp.eq.s32.totalorder %s14, 0
      %p30 = por %p28, %p29
      %p31 = scmp.ne.s32.totalorder %s19, %s20
      %p32 = scmp.eq.s32.totalorder %s15, 1
      %p33 = por %p31, %p32
      %p35 = scmp.ne.s32.totalorder %s20, %s34
      %p36 = scmp.eq.s32.totalorder %s15, 0
      %p37 = por %p35, %p36
      %s38 = ssub.s32 %s9, %s16
      %p39 = scmp.eq.s32.totalorder %s38, 0
      %s41 = sadd.s32 %s40, 1
      %s42 = scalar_select %p39, %s40, %s41
      %p45 = pneg %p39
      %p46 = scmp.eq.s32.totalorder %s9, 1
      %p47 = por %p45, %p46
      %p48 = scmp.ne.s32.totalorder %s40, %s43
      %p49 = scmp.eq.s32.totalorder %s9, 0
      %p50 = por %p48, %p49
      %p51 = scmp.ne.s32.totalorder %s40, %s43
      %p52 = scmp.eq.s32.totalorder %s14, 1
      %p53 = por %p51, %p52
      %p54 = scmp.ne.s32.totalorder %s43, %s44
      %p55 = scmp.eq.s32.totalorder %s14, 0
      %p56 = por %p54, %p55
      %p57 = scmp.ne.s32.totalorder %s43, %s44
      %p58 = scmp.eq.s32.totalorder %s15, 1
      %p59 = por %p57, %p58
      %p61 = scmp.ne.s32.totalorder %s44, %s60
      %p62 = scmp.eq.s32.totalorder %s15, 0
      %p63 = por %p61, %p62
      %s64 = ssub.s32 %s9, %s16
      %p65 = scmp.eq.s32.totalorder %s64, 0
      %s67 = sadd.s32 %s66, 1
      %s68 = scalar_select %p65, %s66, %s67
      %p71 = pneg %p65
      %p72 = scmp.eq.s32.totalorder %s9, 1
      %p73 = por %p71, %p72
      %p74 = scmp.ne.s32.totalorder %s66, %s69
      %p75 = scmp.eq.s32.totalorder %s9, 0
      %p76 = por %p74, %p75
      %p77 = scmp.ne.s32.totalorder %s66, %s69
      %p78 = scmp.eq.s32.totalorder %s14, 1
      %p79 = por %p77, %p78
      %p80 = scmp.ne.s32.totalorder %s69, %s70
      %p81 = scmp.eq.s32.totalorder %s14, 0
      %p82 = por %p80, %p81
      %p83 = scmp.ne.s32.totalorder %s69, %s70
      %p84 = scmp.eq.s32.totalorder %s15, 1
      %p85 = por %p83, %p84
      %p87 = scmp.ne.s32.totalorder %s70, %s86
      %p88 = scmp.eq.s32.totalorder %s15, 0
      %p89 = por %p87, %p88
      %s90 = ssub.s32 %s9, %s16
      %p91 = scmp.eq.s32.totalorder %s90, 0
      %s93 = sadd.s32 %s92, 1
      %s94 = scalar_select %p91, %s92, %s93
      %p97 = pneg %p91
      %p98 = scmp.eq.s32.totalorder %s9, 1
      %p99 = por %p97, %p98
      %p100 = scmp.ne.s32.totalorder %s92, %s95
      %p101 = scmp.eq.s32.totalorder %s9, 0
      %p102 = por %p100, %p101
      %p103 = scmp.ne.s32.totalorder %s92, %s95
      %p104 = scmp.eq.s32.totalorder %s14, 1
      %p105 = por %p103, %p104
      %p106 = scmp.ne.s32.totalorder %s95, %s96
      %p107 = scmp.eq.s32.totalorder %s14, 0
      %p108 = por %p106, %p107
      %p109 = scmp.ne.s32.totalorder %s95, %s96
      %p110 = scmp.eq.s32.totalorder %s15, 1
      %p111 = por %p109, %p110
      %p113 = scmp.ne.s32.totalorder %s96, %s112
      %p114 = scmp.eq.s32.totalorder %s15, 0
      %p115 = por %p113, %p114
      %p116 = scmp.le.s32.totalorder 1, %s9
      %p117 = scmp.lt.s32.totalorder %s9, 3
      %p118 = pnand %p116, %p117
      %p119 = pneg %p118
      // Predicated region
      $region9: #{_forward_impl.2} parent=5 // pred_check
        _
      $region10: #{_forward_impl.2} parent=5 // pred_check_branch
        %121 = sbr.rel (%p118) target = $region12
      $region11: #{_forward_impl.2} parent=5 // pred_region
        %s122 = ssub.s32 %s9, 1
        // Predicated region
        $region13: #{_forward_impl.2} parent=11 // pred_check
          %p123 = pneg %p30
        $region14: #{_forward_impl.2} parent=11 // pred_check_branch
          %125 = sbr.rel (%p123) target = $region16
        $region15: #{_forward_impl.2} parent=11 // pred_region
          _
        $region16: #{_forward_impl.2} parent=11 // pred_fallthru
          _
      $region12: #{_forward_impl.2} parent=5 // pred_fallthru
        _
      %p126 = scmp.lt.s32.totalorder %s9, 2
      // Predicated region
      $region17: #{_forward_impl.2} parent=5 // pred_check
        %p127 = pneg %p126
      $region18: #{_forward_impl.2} parent=5 // pred_check_branch
        %129 = sbr.rel (%p127) target = $region20
      $region19: #{_forward_impl.2} parent=5 // pred_region
        // Predicated region
        $region21: #{_forward_impl.2} parent=19 // pred_check
          %p130 = pneg %p50
        $region22: #{_forward_impl.2} parent=19 // pred_check_branch
          %132 = sbr.rel (%p130) target = $region24
        $region23: #{_forward_impl.2} parent=19 // pred_region
          %s133 = sand.u32 %s40, 1
          %s134 = sand.u32 %s40, 1
          %s135 = smul.addr %s134, 672
          %s136 = scalar_lea.vmem [#allocation2], %s135
          %s137 = smul.u32 2, %s9
          %s138 = smul.addr %s137, 4
          %s139 = scalar_lea.vmem %s1, %s138
          // Predicated region
          $region25: #{_forward_impl.2} parent=23 // pred_check
            _
          $region26: #{_forward_impl.2} parent=23 // pred_check_branch
            %141 = sbr.rel (0) target = $region28
          $region27: #{_forward_impl.2} parent=23 // pred_region
            // Predicated region
            $region29: #{_forward_impl.2} parent=27 // pred_check
              _
            $region30: #{_forward_impl.2} parent=27 // pred_check_branch
              %143 = sbr.rel (0) target = $region32
            $region31: #{_forward_impl.2} parent=27 // pred_region
              // Predicated region
              $region44: #{_forward_impl.2} parent=31 // pred_check
                _
              $region45: #{_forward_impl.2} parent=31 // pred_check_branch
                %324 = sbr.rel (0) target = $region47
              $region46: #{_forward_impl.2} parent=31 // pred_region
                loop: start=0, step=1, limit=1
                $region48: #{_forward_impl.2} parent=46 // loop_pre_header
                  _
                $region49: #{_forward_impl.2} parent=46 // loop_header
                  %s326 = sphi 0, %s330
                  %p327 = scmp.ge.s32.totalorder %s326, 1
                  %s331 = sphi %s139, %s139
                  %s332 = sphi %s136, %s136
                $region50: #{_forward_impl.2} parent=46 // loop_header_branch
                  %329 = sbr.rel (%p327) target = $region54
                $region51: #{_forward_impl.2} parent=46 // loop_body
                  %v333 = vld [vmem:[%s331] sm:$0xff]
                  %334 = vst [vmem:[%s332] sm:$0xff] %v333
                  %v335 = vld [vmem:[%s331 + $0x10] sm:$0xff]
                  %336 = vst [vmem:[%s332 + $0x8] sm:$0xff] %v335
                  %v337 = vld [vmem:[%s331 + $0x20] sm:$0xff]
                  %338 = vst [vmem:[%s332 + $0x10] sm:$0xff] %v337
                  %v339 = vld [vmem:[%s331 + $0x30] sm:$0xff]
                  %340 = vst [vmem:[%s332 + $0x18] sm:$0xff] %v339
                  %v341 = vld [vmem:[%s331 + $0x40] sm:$0xff]
                  %342 = vst [vmem:[%s332 + $0x20] sm:$0xff] %v341
                  %v343 = vld [vmem:[%s331 + $0x50] sm:$0xff]
                  %344 = vst [vmem:[%s332 + $0x28] sm:$0xff] %v343
                  %v345 = vld [vmem:[%s331 + $0x60] sm:$0xff]
                  %346 = vst [vmem:[%s332 + $0x30] sm:$0xff] %v345
                  %v347 = vld [vmem:[%s331 + $0x70] sm:$0xff]
                  %348 = vst [vmem:[%s332 + $0x38] sm:$0xff] %v347
                  %v349 = vld [vmem:[%s331 + $0x80] sm:$0xff]
                  %350 = vst [vmem:[%s332 + $0x40] sm:$0xff] %v349
                  %v351 = vld [vmem:[%s331 + $0x90] sm:$0xff]
                  %352 = vst [vmem:[%s332 + $0x48] sm:$0xff] %v351
                  %v353 = vld [vmem:[%s331 + $0xa0] sm:$0xff]
                  %354 = vst [vmem:[%s332 + $0x50] sm:$0xff] %v353
                  %v355 = vld [vmem:[%s331 + $0xb0] sm:$0xff]
                  %356 = vst [vmem:[%s332 + $0x58] sm:$0xff] %v355
                  %v357 = vld [vmem:[%s331 + $0xc0] sm:$0xff]
                  %358 = vst [vmem:[%s332 + $0x60] sm:$0xff] %v357
                  %v359 = vld [vmem:[%s331 + $0xd0] sm:$0xff]
                  %360 = vst [vmem:[%s332 + $0x68] sm:$0xff] %v359
                  %v361 = vld [vmem:[%s331 + $0xe0] sm:$0xff]
                  %362 = vst [vmem:[%s332 + $0x70] sm:$0xff] %v361
                  %v363 = vld [vmem:[%s331 + $0xf0] sm:$0xff]
                  %364 = vst [vmem:[%s332 + $0x78] sm:$0xff] %v363
                  %v365 = vld [vmem:[%s331 + $0x100] sm:$0xff]
                  %366 = vst [vmem:[%s332 + $0x80] sm:$0xff] %v365
                  %v367 = vld [vmem:[%s331 + $0x110] sm:$0xff]
                  %368 = vst [vmem:[%s332 + $0x88] sm:$0xff] %v367
                  %v369 = vld [vmem:[%s331 + $0x120] sm:$0xff]
                  %370 = vst [vmem:[%s332 + $0x90] sm:$0xff] %v369
                  %v371 = vld [vmem:[%s331 + $0x130] sm:$0xff]
                  %372 = vst [vmem:[%s332 + $0x98] sm:$0xff] %v371
                  %v373 = vld [vmem:[%s331 + $0x140] sm:$0xff]
                  %374 = vst [vmem:[%s332 + $0xa0] sm:$0xff] %v373
                  %v375 = vld [vmem:[%s331 + $0x150] sm:$0xff]
                  %376 = vst [vmem:[%s332 + $0xa8] sm:$0xff] %v375
                  %v377 = vld [vmem:[%s331 + $0x160] sm:$0xff]
                  %378 = vst [vmem:[%s332 + $0xb0] sm:$0xff] %v377
                  %v379 = vld [vmem:[%s331 + $0x170] sm:$0xff]
                  %380 = vst [vmem:[%s332 + $0xb8] sm:$0xff] %v379
                  %v381 = vld [vmem:[%s331 + $0x180] sm:$0xff]
                  %382 = vst [vmem:[%s332 + $0xc0] sm:$0xff] %v381
                  %v383 = vld [vmem:[%s331 + $0x190] sm:$0xff]
                  %384 = vst [vmem:[%s332 + $0xc8] sm:$0xff] %v383
                  %v385 = vld [vmem:[%s331 + $0x1a0] sm:$0xff]
                  %386 = vst [vmem:[%s332 + $0xd0] sm:$0xff] %v385
                  %v387 = vld [vmem:[%s331 + $0x1b0] sm:$0xff]
                  %388 = vst [vmem:[%s332 + $0xd8] sm:$0xff] %v387
                  %v389 = vld [vmem:[%s331 + $0x1c0] sm:$0xff]
                  %390 = vst [vmem:[%s332 + $0xe0] sm:$0xff] %v389
                  %v391 = vld [vmem:[%s331 + $0x1d0] sm:$0xff]
                  %392 = vst [vmem:[%s332 + $0xe8] sm:$0xff] %v391
                  %v393 = vld [vmem:[%s331 + $0x1e0] sm:$0xff]
                  %394 = vst [vmem:[%s332 + $0xf0] sm:$0xff] %v393
                  %v395 = vld [vmem:[%s331 + $0x1f0] sm:$0xff]
                  %396 = vst [vmem:[%s332 + $0xf8] sm:$0xff] %v395
                  %v397 = vld [vmem:[%s331 + $0x200] sm:$0xff]
                  %398 = vst [vmem:[%s332 + $0x100] sm:$0xff] %v397
                  %v399 = vld [vmem:[%s331 + $0x210] sm:$0xff]
                  %400 = vst [vmem:[%s332 + $0x108] sm:$0xff] %v399
                  %v401 = vld [vmem:[%s331 + $0x220] sm:$0xff]
                  %402 = vst [vmem:[%s332 + $0x110] sm:$0xff] %v401
                  %v403 = vld [vmem:[%s331 + $0x230] sm:$0xff]
                  %404 = vst [vmem:[%s332 + $0x118] sm:$0xff] %v403
                  %v405 = vld [vmem:[%s331 + $0x240] sm:$0xff]
                  %406 = vst [vmem:[%s332 + $0x120] sm:$0xff] %v405
                  %v407 = vld [vmem:[%s331 + $0x250] sm:$0xff]
                  %408 = vst [vmem:[%s332 + $0x128] sm:$0xff] %v407
                  %v409 = vld [vmem:[%s331 + $0x260] sm:$0xff]
                  %410 = vst [vmem:[%s332 + $0x130] sm:$0xff] %v409
                  %v411 = vld [vmem:[%s331 + $0x270] sm:$0xff]
                  %412 = vst [vmem:[%s332 + $0x138] sm:$0xff] %v411
                  %v413 = vld [vmem:[%s331 + $0x280] sm:$0xff]
                  %414 = vst [vmem:[%s332 + $0x140] sm:$0xff] %v413
                  %v415 = vld [vmem:[%s331 + $0x290] sm:$0xff]
                  %416 = vst [vmem:[%s332 + $0x148] sm:$0xff] %v415
                  %v417 = vld [vmem:[%s331 + $0x2a0] sm:$0xff]
                  %418 = vst [vmem:[%s332 + $0x150] sm:$0xff] %v417
                  %v419 = vld [vmem:[%s331 + $0x2b0] sm:$0xff]
                  %420 = vst [vmem:[%s332 + $0x158] sm:$0xff] %v419
                  %v421 = vld [vmem:[%s331 + $0x2c0] sm:$0xff]
                  %422 = vst [vmem:[%s332 + $0x160] sm:$0xff] %v421
                  %v423 = vld [vmem:[%s331 + $0x2d0] sm:$0xff]
                  %424 = vst [vmem:[%s332 + $0x168] sm:$0xff] %v423
                  %v425 = vld [vmem:[%s331 + $0x2e0] sm:$0xff]
                  %426 = vst [vmem:[%s332 + $0x170] sm:$0xff] %v425
                  %v427 = vld [vmem:[%s331 + $0x2f0] sm:$0xff]
                  %428 = vst [vmem:[%s332 + $0x178] sm:$0xff] %v427
                  %v429 = vld [vmem:[%s331 + $0x300] sm:$0xff]
                  %430 = vst [vmem:[%s332 + $0x180] sm:$0xff] %v429
                  %v431 = vld [vmem:[%s331 + $0x310] sm:$0xff]
                  %432 = vst [vmem:[%s332 + $0x188] sm:$0xff] %v431
                  %v433 = vld [vmem:[%s331 + $0x320] sm:$0xff]
                  %434 = vst [vmem:[%s332 + $0x190] sm:$0xff] %v433
                  %v435 = vld [vmem:[%s331 + $0x330] sm:$0xff]
                  %436 = vst [vmem:[%s332 + $0x198] sm:$0xff] %v435
                  %v437 = vld [vmem:[%s331 + $0x340] sm:$0xff]
                  %438 = vst [vmem:[%s332 + $0x1a0] sm:$0xff] %v437
                  %v439 = vld [vmem:[%s331 + $0x350] sm:$0xff]
                  %440 = vst [vmem:[%s332 + $0x1a8] sm:$0xff] %v439
                  %v441 = vld [vmem:[%s331 + $0x360] sm:$0xff]
                  %442 = vst [vmem:[%s332 + $0x1b0] sm:$0xff] %v441
                  %v443 = vld [vmem:[%s331 + $0x370] sm:$0xff]
                  %444 = vst [vmem:[%s332 + $0x1b8] sm:$0xff] %v443
                  %v445 = vld [vmem:[%s331 + $0x380] sm:$0xff]
                  %446 = vst [vmem:[%s332 + $0x1c0] sm:$0xff] %v445
                  %v447 = vld [vmem:[%s331 + $0x390] sm:$0xff]
                  %448 = vst [vmem:[%s332 + $0x1c8] sm:$0xff] %v447
                  %v449 = vld [vmem:[%s331 + $0x3a0] sm:$0xff]
                  %450 = vst [vmem:[%s332 + $0x1d0] sm:$0xff] %v449
                  %v451 = vld [vmem:[%s331 + $0x3b0] sm:$0xff]
                  %452 = vst [vmem:[%s332 + $0x1d8] sm:$0xff] %v451
                  %v453 = vld [vmem:[%s331 + $0x3c0] sm:$0xff]
                  %454 = vst [vmem:[%s332 + $0x1e0] sm:$0xff] %v453
                  %v455 = vld [vmem:[%s331 + $0x3d0] sm:$0xff]
                  %456 = vst [vmem:[%s332 + $0x1e8] sm:$0xff] %v455
                  %v457 = vld [vmem:[%s331 + $0x3e0] sm:$0xff]
                  %458 = vst [vmem:[%s332 + $0x1f0] sm:$0xff] %v457
                  %v459 = vld [vmem:[%s331 + $0x3f0] sm:$0xff]
                  %460 = vst [vmem:[%s332 + $0x1f8] sm:$0xff] %v459
                  %v461 = vld [vmem:[%s331 + $0x400] sm:$0xff]
                  %462 = vst [vmem:[%s332 + $0x200] sm:$0xff] %v461
                  %v463 = vld [vmem:[%s331 + $0x410] sm:$0xff]
                  %464 = vst [vmem:[%s332 + $0x208] sm:$0xff] %v463
                  %v465 = vld [vmem:[%s331 + $0x420] sm:$0xff]
                  %466 = vst [vmem:[%s332 + $0x210] sm:$0xff] %v465
                  %v467 = vld [vmem:[%s331 + $0x430] sm:$0xff]
                  %468 = vst [vmem:[%s332 + $0x218] sm:$0xff] %v467
                  %v469 = vld [vmem:[%s331 + $0x440] sm:$0xff]
                  %470 = vst [vmem:[%s332 + $0x220] sm:$0xff] %v469
                  %v471 = vld [vmem:[%s331 + $0x450] sm:$0xff]
                  %472 = vst [vmem:[%s332 + $0x228] sm:$0xff] %v471
                  %v473 = vld [vmem:[%s331 + $0x460] sm:$0xff]
                  %474 = vst [vmem:[%s332 + $0x230] sm:$0xff] %v473
                  %v475 = vld [vmem:[%s331 + $0x470] sm:$0xff]
                  %476 = vst [vmem:[%s332 + $0x238] sm:$0xff] %v475
                  %v477 = vld [vmem:[%s331 + $0x480] sm:$0xff]
                  %478 = vst [vmem:[%s332 + $0x240] sm:$0xff] %v477
                  %v479 = vld [vmem:[%s331 + $0x490] sm:$0xff]
                  %480 = vst [vmem:[%s332 + $0x248] sm:$0xff] %v479
                  %v481 = vld [vmem:[%s331 + $0x4a0] sm:$0xff]
                  %482 = vst [vmem:[%s332 + $0x250] sm:$0xff] %v481
                  %v483 = vld [vmem:[%s331 + $0x4b0] sm:$0xff]
                  %484 = vst [vmem:[%s332 + $0x258] sm:$0xff] %v483
                  %v485 = vld [vmem:[%s331 + $0x4c0] sm:$0xff]
                  %486 = vst [vmem:[%s332 + $0x260] sm:$0xff] %v485
                  %v487 = vld [vmem:[%s331 + $0x4d0] sm:$0xff]
                  %488 = vst [vmem:[%s332 + $0x268] sm:$0xff] %v487
                  %v489 = vld [vmem:[%s331 + $0x4e0] sm:$0xff]
                  %490 = vst [vmem:[%s332 + $0x270] sm:$0xff] %v489
                  %v491 = vld [vmem:[%s331 + $0x4f0] sm:$0xff]
                  %492 = vst [vmem:[%s332 + $0x278] sm:$0xff] %v491
                  %v493 = vld [vmem:[%s331 + $0x500] sm:$0xff]
                  %494 = vst [vmem:[%s332 + $0x280] sm:$0xff] %v493
                  %v495 = vld [vmem:[%s331 + $0x510] sm:$0xff]
                  %496 = vst [vmem:[%s332 + $0x288] sm:$0xff] %v495
                  %v497 = vld [vmem:[%s331 + $0x520] sm:$0xff]
                  %498 = vst [vmem:[%s332 + $0x290] sm:$0xff] %v497
                  %v499 = vld [vmem:[%s331 + $0x530] sm:$0xff]
                  %500 = vst [vmem:[%s332 + $0x298] sm:$0xff] %v499
                $region52: #{_forward_impl.2} parent=46 // loop_footer
                  %s330 = sadd.s32 1, %s326
                $region53: #{_forward_impl.2} parent=46 // loop_footer_branch
                  %325 = sbr.rel target = $region49
                $region54: #{_forward_impl.2} parent=46 // loop_exit
                  _
              $region47: #{_forward_impl.2} parent=31 // pred_fallthru
                _
              // Predicated region
              $region55: #{_forward_impl.2} parent=31 // pred_check
                _
              $region56: #{_forward_impl.2} parent=31 // pred_check_branch
                %502 = sbr.rel target = $region58
              $region57: #{_forward_impl.2} parent=31 // pred_region
                _
              $region58: #{_forward_impl.2} parent=31 // pred_fallthru
                _
            $region32: #{_forward_impl.2} parent=27 // pred_fallthru
              _
            // Predicated region
            $region33: #{_forward_impl.2} parent=27 // pred_check
              _
            $region34: #{_forward_impl.2} parent=27 // pred_check_branch
              %145 = sbr.rel target = $region36
            $region35: #{_forward_impl.2} parent=27 // pred_region
              loop: start=0, step=1, limit=1
              $region37: #{_forward_impl.2} parent=35 // loop_pre_header
                _
              $region38: #{_forward_impl.2} parent=35 // loop_header
                %s148 = sphi 0, %s152
                %p149 = scmp.ge.s32.totalorder %s148, 1
                %s153 = sphi %s139, %s139
                %s154 = sphi %s136, %s136
              $region39: #{_forward_impl.2} parent=35 // loop_header_branch
                %151 = sbr.rel (%p149) target = $region43
              $region40: #{_forward_impl.2} parent=35 // loop_body
                %v155 = vld [vmem:[%s153] sm:$0xff]
                %156 = vst [vmem:[%s154] sm:$0xff] %v155
                %v157 = vld [vmem:[%s153 + $0x10] sm:$0xff]
                %158 = vst [vmem:[%s154 + $0x8] sm:$0xff] %v157
                %v159 = vld [vmem:[%s153 + $0x20] sm:$0xff]
                %160 = vst [vmem:[%s154 + $0x10] sm:$0xff] %v159
                %v161 = vld [vmem:[%s153 + $0x30] sm:$0xff]
                %162 = vst [vmem:[%s154 + $0x18] sm:$0xff] %v161
                %v163 = vld [vmem:[%s153 + $0x40] sm:$0xff]
                %164 = vst [vmem:[%s154 + $0x20] sm:$0xff] %v163
                %v165 = vld [vmem:[%s153 + $0x50] sm:$0xff]
                %166 = vst [vmem:[%s154 + $0x28] sm:$0xff] %v165
                %v167 = vld [vmem:[%s153 + $0x60] sm:$0xff]
                %168 = vst [vmem:[%s154 + $0x30] sm:$0xff] %v167
                %v169 = vld [vmem:[%s153 + $0x70] sm:$0xff]
                %170 = vst [vmem:[%s154 + $0x38] sm:$0xff] %v169
                %v171 = vld [vmem:[%s153 + $0x80] sm:$0xff]
                %172 = vst [vmem:[%s154 + $0x40] sm:$0xff] %v171
                %v173 = vld [vmem:[%s153 + $0x90] sm:$0xff]
                %174 = vst [vmem:[%s154 + $0x48] sm:$0xff] %v173
                %v175 = vld [vmem:[%s153 + $0xa0] sm:$0xff]
                %176 = vst [vmem:[%s154 + $0x50] sm:$0xff] %v175
                %v177 = vld [vmem:[%s153 + $0xb0] sm:$0xff]
                %178 = vst [vmem:[%s154 + $0x58] sm:$0xff] %v177
                %v179 = vld [vmem:[%s153 + $0xc0] sm:$0xff]
                %180 = vst [vmem:[%s154 + $0x60] sm:$0xff] %v179
                %v181 = vld [vmem:[%s153 + $0xd0] sm:$0xff]
                %182 = vst [vmem:[%s154 + $0x68] sm:$0xff] %v181
                %v183 = vld [vmem:[%s153 + $0xe0] sm:$0xff]
                %184 = vst [vmem:[%s154 + $0x70] sm:$0xff] %v183
                %v185 = vld [vmem:[%s153 + $0xf0] sm:$0xff]
                %186 = vst [vmem:[%s154 + $0x78] sm:$0xff] %v185
                %v187 = vld [vmem:[%s153 + $0x100] sm:$0xff]
                %188 = vst [vmem:[%s154 + $0x80] sm:$0xff] %v187
                %v189 = vld [vmem:[%s153 + $0x110] sm:$0xff]
                %190 = vst [vmem:[%s154 + $0x88] sm:$0xff] %v189
                %v191 = vld [vmem:[%s153 + $0x120] sm:$0xff]
                %192 = vst [vmem:[%s154 + $0x90] sm:$0xff] %v191
                %v193 = vld [vmem:[%s153 + $0x130] sm:$0xff]
                %194 = vst [vmem:[%s154 + $0x98] sm:$0xff] %v193
                %v195 = vld [vmem:[%s153 + $0x140] sm:$0xff]
                %196 = vst [vmem:[%s154 + $0xa0] sm:$0xff] %v195
                %v197 = vld [vmem:[%s153 + $0x150] sm:$0xff]
                %198 = vst [vmem:[%s154 + $0xa8] sm:$0xff] %v197
                %v199 = vld [vmem:[%s153 + $0x160] sm:$0xff]
                %200 = vst [vmem:[%s154 + $0xb0] sm:$0xff] %v199
                %v201 = vld [vmem:[%s153 + $0x170] sm:$0xff]
                %202 = vst [vmem:[%s154 + $0xb8] sm:$0xff] %v201
                %v203 = vld [vmem:[%s153 + $0x180] sm:$0xff]
                %204 = vst [vmem:[%s154 + $0xc0] sm:$0xff] %v203
                %v205 = vld [vmem:[%s153 + $0x190] sm:$0xff]
                %206 = vst [vmem:[%s154 + $0xc8] sm:$0xff] %v205
                %v207 = vld [vmem:[%s153 + $0x1a0] sm:$0xff]
                %208 = vst [vmem:[%s154 + $0xd0] sm:$0xff] %v207
                %v209 = vld [vmem:[%s153 + $0x1b0] sm:$0xff]
                %210 = vst [vmem:[%s154 + $0xd8] sm:$0xff] %v209
                %v211 = vld [vmem:[%s153 + $0x1c0] sm:$0xff]
                %212 = vst [vmem:[%s154 + $0xe0] sm:$0xff] %v211
                %v213 = vld [vmem:[%s153 + $0x1d0] sm:$0xff]
                %214 = vst [vmem:[%s154 + $0xe8] sm:$0xff] %v213
                %v215 = vld [vmem:[%s153 + $0x1e0] sm:$0xff]
                %216 = vst [vmem:[%s154 + $0xf0] sm:$0xff] %v215
                %v217 = vld [vmem:[%s153 + $0x1f0] sm:$0xff]
                %218 = vst [vmem:[%s154 + $0xf8] sm:$0xff] %v217
                %v219 = vld [vmem:[%s153 + $0x200] sm:$0xff]
                %220 = vst [vmem:[%s154 + $0x100] sm:$0xff] %v219
                %v221 = vld [vmem:[%s153 + $0x210] sm:$0xff]
                %222 = vst [vmem:[%s154 + $0x108] sm:$0xff] %v221
                %v223 = vld [vmem:[%s153 + $0x220] sm:$0xff]
                %224 = vst [vmem:[%s154 + $0x110] sm:$0xff] %v223
                %v225 = vld [vmem:[%s153 + $0x230] sm:$0xff]
                %226 = vst [vmem:[%s154 + $0x118] sm:$0xff] %v225
                %v227 = vld [vmem:[%s153 + $0x240] sm:$0xff]
                %228 = vst [vmem:[%s154 + $0x120] sm:$0xff] %v227
                %v229 = vld [vmem:[%s153 + $0x250] sm:$0xff]
                %230 = vst [vmem:[%s154 + $0x128] sm:$0xff] %v229
                %v231 = vld [vmem:[%s153 + $0x260] sm:$0xff]
                %232 = vst [vmem:[%s154 + $0x130] sm:$0xff] %v231
                %v233 = vld [vmem:[%s153 + $0x270] sm:$0xff]
                %234 = vst [vmem:[%s154 + $0x138] sm:$0xff] %v233
                %v235 = vld [vmem:[%s153 + $0x280] sm:$0xff]
                %236 = vst [vmem:[%s154 + $0x140] sm:$0xff] %v235
                %v237 = vld [vmem:[%s153 + $0x290] sm:$0xff]
                %238 = vst [vmem:[%s154 + $0x148] sm:$0xff] %v237
                %v239 = vld [vmem:[%s153 + $0x2a0] sm:$0xff]
                %240 = vst [vmem:[%s154 + $0x150] sm:$0xff] %v239
                %v241 = vld [vmem:[%s153 + $0x2b0] sm:$0xff]
                %242 = vst [vmem:[%s154 + $0x158] sm:$0xff] %v241
                %v243 = vld [vmem:[%s153 + $0x2c0] sm:$0xff]
                %244 = vst [vmem:[%s154 + $0x160] sm:$0xff] %v243
                %v245 = vld [vmem:[%s153 + $0x2d0] sm:$0xff]
                %246 = vst [vmem:[%s154 + $0x168] sm:$0xff] %v245
                %v247 = vld [vmem:[%s153 + $0x2e0] sm:$0xff]
                %248 = vst [vmem:[%s154 + $0x170] sm:$0xff] %v247
                %v249 = vld [vmem:[%s153 + $0x2f0] sm:$0xff]
                %250 = vst [vmem:[%s154 + $0x178] sm:$0xff] %v249
                %v251 = vld [vmem:[%s153 + $0x300] sm:$0xff]
                %252 = vst [vmem:[%s154 + $0x180] sm:$0xff] %v251
                %v253 = vld [vmem:[%s153 + $0x310] sm:$0xff]
                %254 = vst [vmem:[%s154 + $0x188] sm:$0xff] %v253
                %v255 = vld [vmem:[%s153 + $0x320] sm:$0xff]
                %256 = vst [vmem:[%s154 + $0x190] sm:$0xff] %v255
                %v257 = vld [vmem:[%s153 + $0x330] sm:$0xff]
                %258 = vst [vmem:[%s154 + $0x198] sm:$0xff] %v257
                %v259 = vld [vmem:[%s153 + $0x340] sm:$0xff]
                %260 = vst [vmem:[%s154 + $0x1a0] sm:$0xff] %v259
                %v261 = vld [vmem:[%s153 + $0x350] sm:$0xff]
                %262 = vst [vmem:[%s154 + $0x1a8] sm:$0xff] %v261
                %v263 = vld [vmem:[%s153 + $0x360] sm:$0xff]
                %264 = vst [vmem:[%s154 + $0x1b0] sm:$0xff] %v263
                %v265 = vld [vmem:[%s153 + $0x370] sm:$0xff]
                %266 = vst [vmem:[%s154 + $0x1b8] sm:$0xff] %v265
                %v267 = vld [vmem:[%s153 + $0x380] sm:$0xff]
                %268 = vst [vmem:[%s154 + $0x1c0] sm:$0xff] %v267
                %v269 = vld [vmem:[%s153 + $0x390] sm:$0xff]
                %270 = vst [vmem:[%s154 + $0x1c8] sm:$0xff] %v269
                %v271 = vld [vmem:[%s153 + $0x3a0] sm:$0xff]
                %272 = vst [vmem:[%s154 + $0x1d0] sm:$0xff] %v271
                %v273 = vld [vmem:[%s153 + $0x3b0] sm:$0xff]
                %274 = vst [vmem:[%s154 + $0x1d8] sm:$0xff] %v273
                %v275 = vld [vmem:[%s153 + $0x3c0] sm:$0xff]
                %276 = vst [vmem:[%s154 + $0x1e0] sm:$0xff] %v275
                %v277 = vld [vmem:[%s153 + $0x3d0] sm:$0xff]
                %278 = vst [vmem:[%s154 + $0x1e8] sm:$0xff] %v277
                %v279 = vld [vmem:[%s153 + $0x3e0] sm:$0xff]
                %280 = vst [vmem:[%s154 + $0x1f0] sm:$0xff] %v279
                %v281 = vld [vmem:[%s153 + $0x3f0] sm:$0xff]
                %282 = vst [vmem:[%s154 + $0x1f8] sm:$0xff] %v281
                %v283 = vld [vmem:[%s153 + $0x400] sm:$0xff]
                %284 = vst [vmem:[%s154 + $0x200] sm:$0xff] %v283
                %v285 = vld [vmem:[%s153 + $0x410] sm:$0xff]
                %286 = vst [vmem:[%s154 + $0x208] sm:$0xff] %v285
                %v287 = vld [vmem:[%s153 + $0x420] sm:$0xff]
                %288 = vst [vmem:[%s154 + $0x210] sm:$0xff] %v287
                %v289 = vld [vmem:[%s153 + $0x430] sm:$0xff]
                %290 = vst [vmem:[%s154 + $0x218] sm:$0xff] %v289
                %v291 = vld [vmem:[%s153 + $0x440] sm:$0xff]
                %292 = vst [vmem:[%s154 + $0x220] sm:$0xff] %v291
                %v293 = vld [vmem:[%s153 + $0x450] sm:$0xff]
                %294 = vst [vmem:[%s154 + $0x228] sm:$0xff] %v293
                %v295 = vld [vmem:[%s153 + $0x460] sm:$0xff]
                %296 = vst [vmem:[%s154 + $0x230] sm:$0xff] %v295
                %v297 = vld [vmem:[%s153 + $0x470] sm:$0xff]
                %298 = vst [vmem:[%s154 + $0x238] sm:$0xff] %v297
                %v299 = vld [vmem:[%s153 + $0x480] sm:$0xff]
                %300 = vst [vmem:[%s154 + $0x240] sm:$0xff] %v299
                %v301 = vld [vmem:[%s153 + $0x490] sm:$0xff]
                %302 = vst [vmem:[%s154 + $0x248] sm:$0xff] %v301
                %v303 = vld [vmem:[%s153 + $0x4a0] sm:$0xff]
                %304 = vst [vmem:[%s154 + $0x250] sm:$0xff] %v303
                %v305 = vld [vmem:[%s153 + $0x4b0] sm:$0xff]
                %306 = vst [vmem:[%s154 + $0x258] sm:$0xff] %v305
                %v307 = vld [vmem:[%s153 + $0x4c0] sm:$0xff]
                %308 = vst [vmem:[%s154 + $0x260] sm:$0xff] %v307
                %v309 = vld [vmem:[%s153 + $0x4d0] sm:$0xff]
                %310 = vst [vmem:[%s154 + $0x268] sm:$0xff] %v309
                %v311 = vld [vmem:[%s153 + $0x4e0] sm:$0xff]
                %312 = vst [vmem:[%s154 + $0x270] sm:$0xff] %v311
                %v313 = vld [vmem:[%s153 + $0x4f0] sm:$0xff]
                %314 = vst [vmem:[%s154 + $0x278] sm:$0xff] %v313
                %v315 = vld [vmem:[%s153 + $0x500] sm:$0xff]
                %316 = vst [vmem:[%s154 + $0x280] sm:$0xff] %v315
                %v317 = vld [vmem:[%s153 + $0x510] sm:$0xff]
                %318 = vst [vmem:[%s154 + $0x288] sm:$0xff] %v317
                %v319 = vld [vmem:[%s153 + $0x520] sm:$0xff]
                %320 = vst [vmem:[%s154 + $0x290] sm:$0xff] %v319
                %v321 = vld [vmem:[%s153 + $0x530] sm:$0xff]
                %322 = vst [vmem:[%s154 + $0x298] sm:$0xff] %v321
              $region41: #{_forward_impl.2} parent=35 // loop_footer
                %s152 = sadd.s32 1, %s148
              $region42: #{_forward_impl.2} parent=35 // loop_footer_branch
                %147 = sbr.rel target = $region38
              $region43: #{_forward_impl.2} parent=35 // loop_exit
                _
            $region36: #{_forward_impl.2} parent=27 // pred_fallthru
              _
          $region28: #{_forward_impl.2} parent=23 // pred_fallthru
            _
          %503 = vnop
        $region24: #{_forward_impl.2} parent=19 // pred_fallthru
          _
        // Predicated region
        $region59: #{_forward_impl.2} parent=19 // pred_check
          %p504 = pneg %p76
        $region60: #{_forward_impl.2} parent=19 // pred_check_branch
          %506 = sbr.rel (%p504) target = $region62
        $region61: #{_forward_impl.2} parent=19 // pred_region
          %s507 = smul.u32 2, %s9
          %p508 = scmp.lt.s32.totalorder %s507, 3
          %s509 = scalar_select %p508, %s507, 3
          %s510 = smul.addr %s509, 4
          %s511 = scalar_lea.vmem %s2, %s510
          %s512 = smul.u32 2, %s9
        $region62: #{_forward_impl.2} parent=19 // pred_fallthru
          _
      $region20: #{_forward_impl.2} parent=5 // pred_fallthru
        _
      %p513 = scmp.le.s32.totalorder 1, %s9
      %p514 = scmp.lt.s32.totalorder %s9, 3
      %p515 = pnand %p513, %p514
      %p516 = pneg %p515
      // Predicated region
      $region63: #{_forward_impl.2} parent=5 // pred_check
        _
      $region64: #{_forward_impl.2} parent=5 // pred_check_branch
        %518 = sbr.rel (%p515) target = $region66
      $region65: #{_forward_impl.2} parent=5 // pred_region
        %s519 = ssub.s32 %s9, 1
        %s520 = sand.u32 %s43, 1
        %s521 = sand.u32 %s43, 1
        %s522 = smul.addr %s521, 672
        %s523 = scalar_lea.vmem [#allocation2], %s522
        // Predicated region
        $region67: #{_forward_impl.2} parent=65 // pred_check
          %p524 = pneg %p56
        $region68: #{_forward_impl.2} parent=65 // pred_check_branch
          %526 = sbr.rel (%p524) target = $region70
        $region69: #{_forward_impl.2} parent=65 // pred_region
          _
        $region70: #{_forward_impl.2} parent=65 // pred_fallthru
          _
        %p527 = pneg %p30
        %p528 = pneg %p27
        %s529 = sand.u32 %s43, 1
        %s530 = sand.u32 %s43, 1
        %s531 = smul.addr %s530, 672
        %s532 = scalar_lea.vmem [#allocation2], %s531
        %p533 = pneg %p56
        %p534 = pneg %p53
        %s535 = smul.u32 2, %s14
        %p536 = scmp.lt.s32.totalorder %s535, 3
        %s537 = scalar_select %p536, %s535, 3
        %s538 = smul.addr %s537, 4
        %s539 = scalar_lea.vmem %s2, %s538
        %p540 = pneg %p82
        %p541 = pneg %p79
        %p542 = pneg %p108
        %p543 = pneg %p105
        %s544 = sand.u32 %s95, 1
        %s545 = sand.u32 %s95, 1
        %s546 = smul.addr %s545, 16
        %s547 = scalar_lea.vmem [#allocation3], %s546
        %s548 = smul.u32 2, %s14
        %s549 = smul.u32 2, %s14
        %p550 = scmp.lt.s32.totalorder %s549, 3
        %s551 = scalar_select %p550, %s549, 3
        %s552 = smul.addr %s551, 4
        %s553 = scalar_lea.vmem %s2, %s552
        %s554 = smul.u32 2, %s14
        %s555 = smul.u32 2, %s14
        %v557 = vld [vmem:[%s0] sm:$0x3]
        %v558 = vld [vmem:[%s553] sm:$0x77]
        %v559 = vld [vmem:[%s523] sm:$0xff]
        %v560 = vld [vmem:[%s523 + $0x8] sm:$0xff]
        %v561 = vld [vmem:[%s523 + $0x10] sm:$0xff]
        %v562 = vld [vmem:[%s523 + $0x18] sm:$0xff]
        %v563 = vld [vmem:[%s523 + $0x20] sm:$0xff]
        %v564 = vld [vmem:[%s523 + $0x28] sm:$0xff]
        %v565 = vld [vmem:[%s523 + $0x30] sm:$0xff]
        %v566 = vld [vmem:[%s523 + $0x38] sm:$0xff]
        %v567 = vld [vmem:[%s523 + $0x40] sm:$0xff]
        %v568 = vld [vmem:[%s523 + $0x48] sm:$0xff]
        %v569 = vld [vmem:[%s523 + $0x50] sm:$0xff]
        %v570 = vld [vmem:[%s523 + $0x58] sm:$0xff]
        %v571 = vld [vmem:[%s523 + $0x60] sm:$0xff]
        %v572 = vld [vmem:[%s523 + $0x68] sm:$0xff]
        %v573 = vld [vmem:[%s523 + $0x70] sm:$0xff]
        %v574 = vld [vmem:[%s523 + $0x78] sm:$0xff]
        %v575 = vld [vmem:[%s523 + $0x80] sm:$0xff]
        %v576 = vld [vmem:[%s523 + $0x88] sm:$0xff]
        %v577 = vld [vmem:[%s523 + $0x90] sm:$0xff]
        %v578 = vld [vmem:[%s523 + $0x98] sm:$0xff]
        %v579 = vld [vmem:[%s523 + $0xa0] sm:$0xff]
        %v580 = vld [vmem:[%s523 + $0xa8] sm:$0xff]
        %v581 = vld [vmem:[%s523 + $0xb0] sm:$0xff]
        %v582 = vld [vmem:[%s523 + $0xb8] sm:$0xff]
        %v583 = vld [vmem:[%s523 + $0xc0] sm:$0xff]
        %v584 = vld [vmem:[%s523 + $0xc8] sm:$0xff]
        %v585 = vld [vmem:[%s523 + $0xd0] sm:$0xff]
        %v586 = vld [vmem:[%s523 + $0xd8] sm:$0x11]
        %v589 = vunpack.c.l.s4 1966171168
        %v590 = vunpack.c.0.s8 %v589
        %v591 = vlaneseq
        %v592 = vshrl.u32 %v591, 7
        %v593 = vsub.s32 %v590, %v592
        %v594 = vrot.slane %v557, %v593
        %v595 = vcombine.high %v594, %v594
        %v597 = vunpack.c.l.s4 1966171168
        %v598 = vunpack.c.0.s8 %v597
        %v599 = vlaneseq
        %v600 = vshrl.u32 %v599, 7
        %v601 = vsub.s32 %v598, %v600
        %v602 = vrot.slane %v594, %v601
        %v604 = vunpack.c.l.s4 1966171168
        %v605 = vunpack.c.0.s8 %v604
        %v606 = vlaneseq
        %v607 = vshrl.u32 %v606, 7
        %v608 = vsub.s32 %v605, %v607
        %v609 = vrot.slane %v595, %v608
        %v639 = vunpack.c.l.b16 %v559
        %v640 = vunpack.c.h.b16 %v559
        %v641 = vunpack.c.l.b16 %v560
        %v642 = vunpack.c.h.b16 %v560
        %v643 = vunpack.c.l.b16 %v561
        %v644 = vunpack.c.h.b16 %v561
        %v645 = vunpack.c.l.b16 %v562
        %v646 = vunpack.c.h.b16 %v562
        %v647 = vunpack.c.l.b16 %v563
        %v648 = vunpack.c.h.b16 %v563
        %v649 = vunpack.c.l.b16 %v564
        %v650 = vunpack.c.h.b16 %v564
        %v651 = vunpack.c.l.b16 %v565
        %v652 = vunpack.c.h.b16 %v565
        %v653 = vunpack.c.l.b16 %v566
        %v654 = vunpack.c.h.b16 %v566
        %v655 = vunpack.c.l.b16 %v567
        %v656 = vunpack.c.h.b16 %v567
        %v657 = vunpack.c.l.b16 %v568
        %v658 = vunpack.c.h.b16 %v568
        %v659 = vunpack.c.l.b16 %v569
        %v660 = vunpack.c.h.b16 %v569
        %v661 = vunpack.c.l.b16 %v570
        %v662 = vunpack.c.h.b16 %v570
        %v663 = vunpack.c.l.b16 %v571
        %v664 = vunpack.c.h.b16 %v571
        %v665 = vunpack.c.l.b16 %v572
        %v666 = vunpack.c.h.b16 %v572
        %v667 = vunpack.c.l.b16 %v573
        %v668 = vunpack.c.h.b16 %v573
        %v669 = vunpack.c.l.b16 %v574
        %v670 = vunpack.c.h.b16 %v574
        %v671 = vunpack.c.l.b16 %v575
        %v672 = vunpack.c.h.b16 %v575
        %v673 = vunpack.c.l.b16 %v576
        %v674 = vunpack.c.h.b16 %v576
        %v675 = vunpack.c.l.b16 %v577
        %v676 = vunpack.c.h.b16 %v577
        %v677 = vunpack.c.l.b16 %v578
        %v678 = vunpack.c.h.b16 %v578
        %v679 = vunpack.c.l.b16 %v579
        %v680 = vunpack.c.h.b16 %v579
        %v681 = vunpack.c.l.b16 %v580
        %v682 = vunpack.c.h.b16 %v580
        %v683 = vunpack.c.l.b16 %v581
        %v684 = vunpack.c.h.b16 %v581
        %v685 = vunpack.c.l.b16 %v582
        %v686 = vunpack.c.h.b16 %v582
        %v687 = vunpack.c.l.b16 %v583
        %v688 = vunpack.c.h.b16 %v583
        %v689 = vunpack.c.l.b16 %v584
        %v690 = vunpack.c.h.b16 %v584
        %v691 = vunpack.c.l.b16 %v585
        %v692 = vunpack.c.h.b16 %v585
        %v693 = vunpack.c.l.b16 %v586
        %v694 = vunpack.c.h.b16 %v586
        %v695 = vpack.c.b16 %v641, %v639
        %v696 = vpack.c.b16 %v642, %v640
        %v697 = vpack.c.b16 %v645, %v643
        %v698 = vpack.c.b16 %v646, %v644
        %v699 = vpack.c.b16 %v649, %v647
        %v700 = vpack.c.b16 %v650, %v648
        %v701 = vpack.c.b16 %v653, %v651
        %v702 = vpack.c.b16 %v654, %v652
        %v703 = vpack.c.b16 %v657, %v655
        %v704 = vpack.c.b16 %v658, %v656
        %v705 = vpack.c.b16 %v661, %v659
        %v706 = vpack.c.b16 %v662, %v660
        %v707 = vpack.c.b16 %v665, %v663
        %v708 = vpack.c.b16 %v666, %v664
        %v709 = vpack.c.b16 %v669, %v667
        %v710 = vpack.c.b16 %v670, %v668
        %v711 = vpack.c.b16 %v673, %v671
        %v712 = vpack.c.b16 %v674, %v672
        %v713 = vpack.c.b16 %v677, %v675
        %v714 = vpack.c.b16 %v678, %v676
        %v715 = vpack.c.b16 %v681, %v679
        %v716 = vpack.c.b16 %v682, %v680
        %v717 = vpack.c.b16 %v685, %v683
        %v718 = vpack.c.b16 %v686, %v684
        %v719 = vpack.c.b16 %v689, %v687
        %v720 = vpack.c.b16 %v690, %v688
        %v721 = vpack.c.b16 %v693, %v691
        %v722 = vpack.c.b16 %v694, %v692
        %vm749 = vcmask 728064
        %v751 = vsel %vm749, %v609, 0
        %vm753 = vcmask 1043456
        %vm754 = vcmask 1044480
        %v755 = vsel %vm753, 4294967295, 65535
        %v756 = vsel %vm754, %v755, 0
        %v758 = vand.u32 %v721, %v756
        %v761 = vand.u32 %v722, %v756
        %763 = vmatprep.subr.bf16.mxu0 %v696
        %764 = vmatpush1.bf16.msra.mxu0 %v695
        %765 = vmatprep.subr.bf16.mxu0 %v698
        %766 = vmatpush1.bf16.msra.mxu0 %v697
        %767 = vmatprep.subr.bf16.mxu0 %v700
        %768 = vmatpush1.bf16.msra.mxu0 %v699
        %769 = vmatprep.subr.bf16.mxu0 %v702
        %770 = vmatpush1.bf16.msra.mxu0 %v701
        %771 = vmatprep.subr.bf16.mxu0 %v704
        %772 = vmatpush1.bf16.msra.mxu0 %v703
        %773 = vmatprep.subr.bf16.mxu0 %v706
        %774 = vmatpush1.bf16.msra.mxu0 %v705
        %775 = vmatprep.subr.bf16.mxu0 %v708
        %776 = vmatpush1.bf16.msra.mxu0 %v707
        %777 = vmatprep.subr.bf16.mxu0 %v710
        %778 = vmatpush1.bf16.msra.mxu0 %v709
        %779 = vmatprep.subr.bf16.mxu0 %v712
        %780 = vmatpush1.bf16.msra.mxu0 %v711
        %781 = vmatprep.subr.bf16.mxu0 %v714
        %782 = vmatpush1.bf16.msra.mxu0 %v713
        %783 = vmatprep.subr.bf16.mxu0 %v716
        %784 = vmatpush1.bf16.msra.mxu0 %v715
        %785 = vmatprep.subr.bf16.mxu0 %v718
        %786 = vmatpush1.bf16.msra.mxu0 %v717
        %787 = vmatprep.subr.bf16.mxu0 %v720
        %788 = vmatpush1.bf16.msra.mxu0 %v719
        %789 = vmatprep.subr.bf16.mxu0 %v761
        %790 = vmatpush1.bf16.msra.mxu0 %v758
        %791 = vmatprep.subr.bf16.mxu0 0
        %792 = vmatpush1.bf16.msra.mxu0 0
        %793 = vmatprep.subr.bf16.mxu0 0
        %794 = vmatpush1.bf16.msra.mxu0 0
        %795 = vmatprep.mubr.bf16.mxu0 %v751
        %796 = vmatmul.mubr.bf16.gmra.mrb[0].mxu0 %v602
        %v797 = vpop.f32.mrb[0].mxu0
        %v798 = vadd.f32 0.0, %v797
        %v799 = vpop.f32.mrb[0].mxu0
        %v800 = vadd.f32 0.0, %v799
        %v801 = vpop.f32.mrb[0].mxu0
        %v802 = vpop.f32.mrb[0].mxu0
        %803 = vdwg.mxu0
        %v805 = vlaneseq
        %v806 = vshrl.u32 %v805, 7
        %v807 = vsub.s32 0, %v806
        %v808 = vrot.slane %v558, %v807
        %v809 = vlaneseq
        %v810 = vshrl.u32 %v809, 7
        %v811 = vsub.s32 4, %v810
        %v812 = vrot.slane %v558, %v811
        %v815 = vlaneseq
        %v816 = vshrl.u32 %v815, 7
        %v817 = vsub.s32 0, %v816
        %v818 = vrot.slane %v808, %v817
        %v819 = vlaneseq
        %v820 = vshrl.u32 %v819, 7
        %v821 = vsub.s32 0, %v820
        %v822 = vrot.slane %v812, %v821
        %v823 = vadd.f32 %v818, %v798
        %v824 = vadd.f32 %v822, %v800
        %v827 = vcombine.low %v823, %v824
        %v829 = vunpack.c.l.s4 1966171168
        %v830 = vunpack.c.0.s8 %v829
        %v831 = vlaneseq
        %v832 = vshrl.u32 %v831, 7
        %v833 = vsub.s32 %v830, %v832
        %v834 = vrot.slane %v827, %v833
        %v835 = vcombine.high %v834, %v834
        %v837 = vunpack.c.l.s4 1966171168
        %v838 = vunpack.c.0.s8 %v837
        %v839 = vlaneseq
        %v840 = vshrl.u32 %v839, 7
        %v841 = vsub.s32 %v838, %v840
        %v842 = vrot.slane %v834, %v841
        %v844 = vunpack.c.l.s4 1966171168
        %v845 = vunpack.c.0.s8 %v844
        %v846 = vlaneseq
        %v847 = vshrl.u32 %v846, 7
        %v848 = vsub.s32 %v845, %v847
        %v849 = vrot.slane %v835, %v848
        %v852 = vlaneseq
        %vm853 = vcmp.ge.s32.totalorder %v852, 0
        %vm854 = vcmp.lt.s32.totalorder %v852, 256
        %vm855 = vmand %vm853, %vm854
        %856 = vst.msk [vmem:[%s547] ss:$4 sm:$0x3] %vm855, %v842
        %s857 = scalar_lea.vmem %s547, 8 [#allocation3]
        %858 = vst.msk [vmem:[%s857] ss:$4 sm:$0x3] %vm855, %v849
        %s859 = scalar_lea.vmem %s523, 224 [#allocation2]
        %v860 = vld [vmem:[%s859] sm:$0xff]
        %v861 = vld [vmem:[%s859 + $0x8] sm:$0xff]
        %v862 = vld [vmem:[%s859 + $0x10] sm:$0xff]
        %v863 = vld [vmem:[%s859 + $0x18] sm:$0xff]
        %v864 = vld [vmem:[%s859 + $0x20] sm:$0xff]
        %v865 = vld [vmem:[%s859 + $0x28] sm:$0xff]
        %v866 = vld [vmem:[%s859 + $0x30] sm:$0xff]
        %v867 = vld [vmem:[%s859 + $0x38] sm:$0xff]
        %v868 = vld [vmem:[%s859 + $0x40] sm:$0xff]
        %v869 = vld [vmem:[%s859 + $0x48] sm:$0xff]
        %v870 = vld [vmem:[%s859 + $0x50] sm:$0xff]
        %v871 = vld [vmem:[%s859 + $0x58] sm:$0xff]
        %v872 = vld [vmem:[%s859 + $0x60] sm:$0xff]
        %v873 = vld [vmem:[%s859 + $0x68] sm:$0xff]
        %v874 = vld [vmem:[%s859 + $0x70] sm:$0xff]
        %v875 = vld [vmem:[%s859 + $0x78] sm:$0xff]
        %v876 = vld [vmem:[%s859 + $0x80] sm:$0xff]
        %v877 = vld [vmem:[%s859 + $0x88] sm:$0xff]
        %v878 = vld [vmem:[%s859 + $0x90] sm:$0xff]
        %v879 = vld [vmem:[%s859 + $0x98] sm:$0xff]
        %v880 = vld [vmem:[%s859 + $0xa0] sm:$0xff]
        %v881 = vld [vmem:[%s859 + $0xa8] sm:$0xff]
        %v882 = vld [vmem:[%s859 + $0xb0] sm:$0xff]
        %v883 = vld [vmem:[%s859 + $0xb8] sm:$0xff]
        %v884 = vld [vmem:[%s859 + $0xc0] sm:$0xff]
        %v885 = vld [vmem:[%s859 + $0xc8] sm:$0xff]
        %v886 = vld [vmem:[%s859 + $0xd0] sm:$0xff]
        %v887 = vld [vmem:[%s859 + $0xd8] sm:$0x11]
        %v916 = vunpack.c.l.b16 %v860
        %v917 = vunpack.c.h.b16 %v860
        %v918 = vunpack.c.l.b16 %v861
        %v919 = vunpack.c.h.b16 %v861
        %v920 = vunpack.c.l.b16 %v862
        %v921 = vunpack.c.h.b16 %v862
        %v922 = vunpack.c.l.b16 %v863
        %v923 = vunpack.c.h.b16 %v863
        %v924 = vunpack.c.l.b16 %v864
        %v925 = vunpack.c.h.b16 %v864
        %v926 = vunpack.c.l.b16 %v865
        %v927 = vunpack.c.h.b16 %v865
        %v928 = vunpack.c.l.b16 %v866
        %v929 = vunpack.c.h.b16 %v866
        %v930 = vunpack.c.l.b16 %v867
        %v931 = vunpack.c.h.b16 %v867
        %v932 = vunpack.c.l.b16 %v868
        %v933 = vunpack.c.h.b16 %v868
        %v934 = vunpack.c.l.b16 %v869
        %v935 = vunpack.c.h.b16 %v869
        %v936 = vunpack.c.l.b16 %v870
        %v937 = vunpack.c.h.b16 %v870
        %v938 = vunpack.c.l.b16 %v871
        %v939 = vunpack.c.h.b16 %v871
        %v940 = vunpack.c.l.b16 %v872
        %v941 = vunpack.c.h.b16 %v872
        %v942 = vunpack.c.l.b16 %v873
        %v943 = vunpack.c.h.b16 %v873
        %v944 = vunpack.c.l.b16 %v874
        %v945 = vunpack.c.h.b16 %v874
        %v946 = vunpack.c.l.b16 %v875
        %v947 = vunpack.c.h.b16 %v875
        %v948 = vunpack.c.l.b16 %v876
        %v949 = vunpack.c.h.b16 %v876
        %v950 = vunpack.c.l.b16 %v877
        %v951 = vunpack.c.h.b16 %v877
        %v952 = vunpack.c.l.b16 %v878
        %v953 = vunpack.c.h.b16 %v878
        %v954 = vunpack.c.l.b16 %v879
        %v955 = vunpack.c.h.b16 %v879
        %v956 = vunpack.c.l.b16 %v880
        %v957 = vunpack.c.h.b16 %v880
        %v958 = vunpack.c.l.b16 %v881
        %v959 = vunpack.c.h.b16 %v881
        %v960 = vunpack.c.l.b16 %v882
        %v961 = vunpack.c.h.b16 %v882
        %v962 = vunpack.c.l.b16 %v883
        %v963 = vunpack.c.h.b16 %v883
        %v964 = vunpack.c.l.b16 %v884
        %v965 = vunpack.c.h.b16 %v884
        %v966 = vunpack.c.l.b16 %v885
        %v967 = vunpack.c.h.b16 %v885
        %v968 = vunpack.c.l.b16 %v886
        %v969 = vunpack.c.h.b16 %v886
        %v970 = vunpack.c.l.b16 %v887
        %v971 = vunpack.c.h.b16 %v887
        %v972 = vpack.c.b16 %v918, %v916
        %v973 = vpack.c.b16 %v919, %v917
        %v974 = vpack.c.b16 %v922, %v920
        %v975 = vpack.c.b16 %v923, %v921
        %v976 = vpack.c.b16 %v926, %v924
        %v977 = vpack.c.b16 %v927, %v925
        %v978 = vpack.c.b16 %v930, %v928
        %v979 = vpack.c.b16 %v931, %v929
        %v980 = vpack.c.b16 %v934, %v932
        %v981 = vpack.c.b16 %v935, %v933
        %v982 = vpack.c.b16 %v938, %v936
        %v983 = vpack.c.b16 %v939, %v937
        %v984 = vpack.c.b16 %v942, %v940
        %v985 = vpack.c.b16 %v943, %v941
        %v986 = vpack.c.b16 %v946, %v944
        %v987 = vpack.c.b16 %v947, %v945
        %v988 = vpack.c.b16 %v950, %v948
        %v989 = vpack.c.b16 %v951, %v949
        %v990 = vpack.c.b16 %v954, %v952
        %v991 = vpack.c.b16 %v955, %v953
        %v992 = vpack.c.b16 %v958, %v956
        %v993 = vpack.c.b16 %v959, %v957
        %v994 = vpack.c.b16 %v962, %v960
        %v995 = vpack.c.b16 %v963, %v961
        %v996 = vpack.c.b16 %v966, %v964
        %v997 = vpack.c.b16 %v967, %v965
        %v998 = vpack.c.b16 %v970, %v968
        %v999 = vpack.c.b16 %v971, %v969
        %v1027 = vand.u32 %v998, %v756
        %v1030 = vand.u32 %v999, %v756
        %1032 = vmatprep.subr.bf16.mxu0 %v973
        %1033 = vmatpush1.bf16.msra.mxu0 %v972
        %1034 = vmatprep.subr.bf16.mxu0 %v975
        %1035 = vmatpush1.bf16.msra.mxu0 %v974
        %1036 = vmatprep.subr.bf16.mxu0 %v977
        %1037 = vmatpush1.bf16.msra.mxu0 %v976
        %1038 = vmatprep.subr.bf16.mxu0 %v979
        %1039 = vmatpush1.bf16.msra.mxu0 %v978
        %1040 = vmatprep.subr.bf16.mxu0 %v981
        %1041 = vmatpush1.bf16.msra.mxu0 %v980
        %1042 = vmatprep.subr.bf16.mxu0 %v983
        %1043 = vmatpush1.bf16.msra.mxu0 %v982
        %1044 = vmatprep.subr.bf16.mxu0 %v985
        %1045 = vmatpush1.bf16.msra.mxu0 %v984
        %1046 = vmatprep.subr.bf16.mxu0 %v987
        %1047 = vmatpush1.bf16.msra.mxu0 %v986
        %1048 = vmatprep.subr.bf16.mxu0 %v989
        %1049 = vmatpush1.bf16.msra.mxu0 %v988
        %1050 = vmatprep.subr.bf16.mxu0 %v991
        %1051 = vmatpush1.bf16.msra.mxu0 %v990
        %1052 = vmatprep.subr.bf16.mxu0 %v993
        %1053 = vmatpush1.bf16.msra.mxu0 %v992
        %1054 = vmatprep.subr.bf16.mxu0 %v995
        %1055 = vmatpush1.bf16.msra.mxu0 %v994
        %1056 = vmatprep.subr.bf16.mxu0 %v997
        %1057 = vmatpush1.bf16.msra.mxu0 %v996
        %1058 = vmatprep.subr.bf16.mxu0 %v1030
        %1059 = vmatpush1.bf16.msra.mxu0 %v1027
        %1060 = vmatprep.subr.bf16.mxu0 0
        %1061 = vmatpush1.bf16.msra.mxu0 0
        %1062 = vmatprep.subr.bf16.mxu0 0
        %1063 = vmatpush1.bf16.msra.mxu0 0
        %1064 = vmatprep.mubr.bf16.mxu0 %v751
        %1065 = vmatmul.mubr.bf16.gmra.mrb[0].mxu0 %v602
        %v1066 = vpop.f32.mrb[0].mxu0
        %v1067 = vadd.f32 0.0, %v1066
        %v1068 = vpop.f32.mrb[0].mxu0
        %v1069 = vadd.f32 0.0, %v1068
        %v1070 = vpop.f32.mrb[0].mxu0
        %v1071 = vpop.f32.mrb[0].mxu0
        %1072 = vdwg.mxu0
        %v1073 = vlaneseq
        %v1074 = vshrl.u32 %v1073, 7
        %v1075 = vsub.s32 1, %v1074
        %v1076 = vrot.slane %v558, %v1075
        %v1077 = vlaneseq
        %v1078 = vshrl.u32 %v1077, 7
        %v1079 = vsub.s32 5, %v1078
        %v1080 = vrot.slane %v558, %v1079
        %v1083 = vlaneseq
        %v1084 = vshrl.u32 %v1083, 7
        %v1085 = vsub.s32 1, %v1084
        %v1086 = vrot.slane %v1076, %v1085
        %v1087 = vlaneseq
        %v1088 = vshrl.u32 %v1087, 7
        %v1089 = vsub.s32 1, %v1088
        %v1090 = vrot.slane %v1080, %v1089
        %v1091 = vadd.f32 %v1086, %v1067
        %v1092 = vadd.f32 %v1090, %v1069
        %v1095 = vcombine.low %v1091, %v1092
        %v1097 = vunpack.c.l.s4 1966171168
        %v1098 = vunpack.c.0.s8 %v1097
        %v1099 = vlaneseq
        %v1100 = vshrl.u32 %v1099, 7
        %v1101 = vsub.s32 %v1098, %v1100
        %v1102 = vrot.slane %v1095, %v1101
        %v1103 = vcombine.high %v1102, %v1102
        %v1105 = vunpack.c.l.s4 1966171168
        %v1106 = vunpack.c.0.s8 %v1105
        %v1107 = vlaneseq
        %v1108 = vshrl.u32 %v1107, 7
        %v1109 = vsub.s32 %v1106, %v1108
        %v1110 = vrot.slane %v1102, %v1109
        %v1112 = vunpack.c.l.s4 1966171168
        %v1113 = vunpack.c.0.s8 %v1112
        %v1114 = vlaneseq
        %v1115 = vshrl.u32 %v1114, 7
        %v1116 = vsub.s32 %v1113, %v1115
        %v1117 = vrot.slane %v1103, %v1116
        %s1120 = scalar_lea.vmem %s547, 1 [#allocation3]
        %1121 = vst.msk [vmem:[%s1120] ss:$4 sm:$0x3] %vm855, %v1110
        %s1122 = scalar_lea.vmem %s547, 9 [#allocation3]
        %1123 = vst.msk [vmem:[%s1122] ss:$4 sm:$0x3] %vm855, %v1117
        %s1124 = scalar_lea.vmem %s523, 448 [#allocation2]
        %v1125 = vld [vmem:[%s1124] sm:$0xff]
        %v1126 = vld [vmem:[%s1124 + $0x8] sm:$0xff]
        %v1127 = vld [vmem:[%s1124 + $0x10] sm:$0xff]
        %v1128 = vld [vmem:[%s1124 + $0x18] sm:$0xff]
        %v1129 = vld [vmem:[%s1124 + $0x20] sm:$0xff]
        %v1130 = vld [vmem:[%s1124 + $0x28] sm:$0xff]
        %v1131 = vld [vmem:[%s1124 + $0x30] sm:$0xff]
        %v1132 = vld [vmem:[%s1124 + $0x38] sm:$0xff]
        %v1133 = vld [vmem:[%s1124 + $0x40] sm:$0xff]
        %v1134 = vld [vmem:[%s1124 + $0x48] sm:$0xff]
        %v1135 = vld [vmem:[%s1124 + $0x50] sm:$0xff]
        %v1136 = vld [vmem:[%s1124 + $0x58] sm:$0xff]
        %v1137 = vld [vmem:[%s1124 + $0x60] sm:$0xff]
        %v1138 = vld [vmem:[%s1124 + $0x68] sm:$0xff]
        %v1139 = vld [vmem:[%s1124 + $0x70] sm:$0xff]
        %v1140 = vld [vmem:[%s1124 + $0x78] sm:$0xff]
        %v1141 = vld [vmem:[%s1124 + $0x80] sm:$0xff]
        %v1142 = vld [vmem:[%s1124 + $0x88] sm:$0xff]
        %v1143 = vld [vmem:[%s1124 + $0x90] sm:$0xff]
        %v1144 = vld [vmem:[%s1124 + $0x98] sm:$0xff]
        %v1145 = vld [vmem:[%s1124 + $0xa0] sm:$0xff]
        %v1146 = vld [vmem:[%s1124 + $0xa8] sm:$0xff]
        %v1147 = vld [vmem:[%s1124 + $0xb0] sm:$0xff]
        %v1148 = vld [vmem:[%s1124 + $0xb8] sm:$0xff]
        %v1149 = vld [vmem:[%s1124 + $0xc0] sm:$0xff]
        %v1150 = vld [vmem:[%s1124 + $0xc8] sm:$0xff]
        %v1151 = vld [vmem:[%s1124 + $0xd0] sm:$0xff]
        %v1152 = vld [vmem:[%s1124 + $0xd8] sm:$0x11]
        %v1181 = vunpack.c.l.b16 %v1125
        %v1182 = vunpack.c.h.b16 %v1125
        %v1183 = vunpack.c.l.b16 %v1126
        %v1184 = vunpack.c.h.b16 %v1126
        %v1185 = vunpack.c.l.b16 %v1127
        %v1186 = vunpack.c.h.b16 %v1127
        %v1187 = vunpack.c.l.b16 %v1128
        %v1188 = vunpack.c.h.b16 %v1128
        %v1189 = vunpack.c.l.b16 %v1129
        %v1190 = vunpack.c.h.b16 %v1129
        %v1191 = vunpack.c.l.b16 %v1130
        %v1192 = vunpack.c.h.b16 %v1130
        %v1193 = vunpack.c.l.b16 %v1131
        %v1194 = vunpack.c.h.b16 %v1131
        %v1195 = vunpack.c.l.b16 %v1132
        %v1196 = vunpack.c.h.b16 %v1132
        %v1197 = vunpack.c.l.b16 %v1133
        %v1198 = vunpack.c.h.b16 %v1133
        %v1199 = vunpack.c.l.b16 %v1134
        %v1200 = vunpack.c.h.b16 %v1134
        %v1201 = vunpack.c.l.b16 %v1135
        %v1202 = vunpack.c.h.b16 %v1135
        %v1203 = vunpack.c.l.b16 %v1136
        %v1204 = vunpack.c.h.b16 %v1136
        %v1205 = vunpack.c.l.b16 %v1137
        %v1206 = vunpack.c.h.b16 %v1137
        %v1207 = vunpack.c.l.b16 %v1138
        %v1208 = vunpack.c.h.b16 %v1138
        %v1209 = vunpack.c.l.b16 %v1139
        %v1210 = vunpack.c.h.b16 %v1139
        %v1211 = vunpack.c.l.b16 %v1140
        %v1212 = vunpack.c.h.b16 %v1140
        %v1213 = vunpack.c.l.b16 %v1141
        %v1214 = vunpack.c.h.b16 %v1141
        %v1215 = vunpack.c.l.b16 %v1142
        %v1216 = vunpack.c.h.b16 %v1142
        %v1217 = vunpack.c.l.b16 %v1143
        %v1218 = vunpack.c.h.b16 %v1143
        %v1219 = vunpack.c.l.b16 %v1144
        %v1220 = vunpack.c.h.b16 %v1144
        %v1221 = vunpack.c.l.b16 %v1145
        %v1222 = vunpack.c.h.b16 %v1145
        %v1223 = vunpack.c.l.b16 %v1146
        %v1224 = vunpack.c.h.b16 %v1146
        %v1225 = vunpack.c.l.b16 %v1147
        %v1226 = vunpack.c.h.b16 %v1147
        %v1227 = vunpack.c.l.b16 %v1148
        %v1228 = vunpack.c.h.b16 %v1148
        %v1229 = vunpack.c.l.b16 %v1149
        %v1230 = vunpack.c.h.b16 %v1149
        %v1231 = vunpack.c.l.b16 %v1150
        %v1232 = vunpack.c.h.b16 %v1150
        %v1233 = vunpack.c.l.b16 %v1151
        %v1234 = vunpack.c.h.b16 %v1151
        %v1235 = vunpack.c.l.b16 %v1152
        %v1236 = vunpack.c.h.b16 %v1152
        %v1237 = vpack.c.b16 %v1183, %v1181
        %v1238 = vpack.c.b16 %v1184, %v1182
        %v1239 = vpack.c.b16 %v1187, %v1185
        %v1240 = vpack.c.b16 %v1188, %v1186
        %v1241 = vpack.c.b16 %v1191, %v1189
        %v1242 = vpack.c.b16 %v1192, %v1190
        %v1243 = vpack.c.b16 %v1195, %v1193
        %v1244 = vpack.c.b16 %v1196, %v1194
        %v1245 = vpack.c.b16 %v1199, %v1197
        %v1246 = vpack.c.b16 %v1200, %v1198
        %v1247 = vpack.c.b16 %v1203, %v1201
        %v1248 = vpack.c.b16 %v1204, %v1202
        %v1249 = vpack.c.b16 %v1207, %v1205
        %v1250 = vpack.c.b16 %v1208, %v1206
        %v1251 = vpack.c.b16 %v1211, %v1209
        %v1252 = vpack.c.b16 %v1212, %v1210
        %v1253 = vpack.c.b16 %v1215, %v1213
        %v1254 = vpack.c.b16 %v1216, %v1214
        %v1255 = vpack.c.b16 %v1219, %v1217
        %v1256 = vpack.c.b16 %v1220, %v1218
        %v1257 = vpack.c.b16 %v1223, %v1221
        %v1258 = vpack.c.b16 %v1224, %v1222
        %v1259 = vpack.c.b16 %v1227, %v1225
        %v1260 = vpack.c.b16 %v1228, %v1226
        %v1261 = vpack.c.b16 %v1231, %v1229
        %v1262 = vpack.c.b16 %v1232, %v1230
        %v1263 = vpack.c.b16 %v1235, %v1233
        %v1264 = vpack.c.b16 %v1236, %v1234
        %v1292 = vand.u32 %v1263, %v756
        %v1295 = vand.u32 %v1264, %v756
        %1297 = vmatprep.subr.bf16.mxu0 %v1238
        %1298 = vmatpush1.bf16.msra.mxu0 %v1237
        %1299 = vmatprep.subr.bf16.mxu0 %v1240
        %1300 = vmatpush1.bf16.msra.mxu0 %v1239
        %1301 = vmatprep.subr.bf16.mxu0 %v1242
        %1302 = vmatpush1.bf16.msra.mxu0 %v1241
        %1303 = vmatprep.subr.bf16.mxu0 %v1244
        %1304 = vmatpush1.bf16.msra.mxu0 %v1243
        %1305 = vmatprep.subr.bf16.mxu0 %v1246
        %1306 = vmatpush1.bf16.msra.mxu0 %v1245
        %1307 = vmatprep.subr.bf16.mxu0 %v1248
        %1308 = vmatpush1.bf16.msra.mxu0 %v1247
        %1309 = vmatprep.subr.bf16.mxu0 %v1250
        %1310 = vmatpush1.bf16.msra.mxu0 %v1249
        %1311 = vmatprep.subr.bf16.mxu0 %v1252
        %1312 = vmatpush1.bf16.msra.mxu0 %v1251
        %1313 = vmatprep.subr.bf16.mxu0 %v1254
        %1314 = vmatpush1.bf16.msra.mxu0 %v1253
        %1315 = vmatprep.subr.bf16.mxu0 %v1256
        %1316 = vmatpush1.bf16.msra.mxu0 %v1255
        %1317 = vmatprep.subr.bf16.mxu0 %v1258
        %1318 = vmatpush1.bf16.msra.mxu0 %v1257
        %1319 = vmatprep.subr.bf16.mxu0 %v1260
        %1320 = vmatpush1.bf16.msra.mxu0 %v1259
        %1321 = vmatprep.subr.bf16.mxu0 %v1262
        %1322 = vmatpush1.bf16.msra.mxu0 %v1261
        %1323 = vmatprep.subr.bf16.mxu0 %v1295
        %1324 = vmatpush1.bf16.msra.mxu0 %v1292
        %1325 = vmatprep.subr.bf16.mxu0 0
        %1326 = vmatpush1.bf16.msra.mxu0 0
        %1327 = vmatprep.subr.bf16.mxu0 0
        %1328 = vmatpush1.bf16.msra.mxu0 0
        %1329 = vmatprep.mubr.bf16.mxu0 %v751
        %1330 = vmatmul.mubr.bf16.gmra.mrb[0].mxu0 %v602
        %v1331 = vpop.f32.mrb[0].mxu0
        %v1332 = vadd.f32 0.0, %v1331
        %v1333 = vpop.f32.mrb[0].mxu0
        %v1334 = vadd.f32 0.0, %v1333
        %v1335 = vpop.f32.mrb[0].mxu0
        %v1336 = vpop.f32.mrb[0].mxu0
        %1337 = vdwg.mxu0
        %v1338 = vlaneseq
        %v1339 = vshrl.u32 %v1338, 7
        %v1340 = vsub.s32 2, %v1339
        %v1341 = vrot.slane %v558, %v1340
        %v1342 = vlaneseq
        %v1343 = vshrl.u32 %v1342, 7
        %v1344 = vsub.s32 6, %v1343
        %v1345 = vrot.slane %v558, %v1344
        %v1348 = vlaneseq
        %v1349 = vshrl.u32 %v1348, 7
        %v1350 = vsub.s32 2, %v1349
        %v1351 = vrot.slane %v1341, %v1350
        %v1352 = vlaneseq
        %v1353 = vshrl.u32 %v1352, 7
        %v1354 = vsub.s32 2, %v1353
        %v1355 = vrot.slane %v1345, %v1354
        %v1356 = vadd.f32 %v1351, %v1332
        %v1357 = vadd.f32 %v1355, %v1334
        %v1360 = vcombine.low %v1356, %v1357
        %v1362 = vunpack.c.l.s4 1966171168
        %v1363 = vunpack.c.0.s8 %v1362
        %v1364 = vlaneseq
        %v1365 = vshrl.u32 %v1364, 7
        %v1366 = vsub.s32 %v1363, %v1365
        %v1367 = vrot.slane %v1360, %v1366
        %v1368 = vcombine.high %v1367, %v1367
        %v1370 = vunpack.c.l.s4 1966171168
        %v1371 = vunpack.c.0.s8 %v1370
        %v1372 = vlaneseq
        %v1373 = vshrl.u32 %v1372, 7
        %v1374 = vsub.s32 %v1371, %v1373
        %v1375 = vrot.slane %v1367, %v1374
        %v1377 = vunpack.c.l.s4 1966171168
        %v1378 = vunpack.c.0.s8 %v1377
        %v1379 = vlaneseq
        %v1380 = vshrl.u32 %v1379, 7
        %v1381 = vsub.s32 %v1378, %v1380
        %v1382 = vrot.slane %v1368, %v1381
        %s1385 = scalar_lea.vmem %s547, 2 [#allocation3]
        %1386 = vst.msk [vmem:[%s1385] ss:$4 sm:$0x3] %vm855, %v1375
        %s1387 = scalar_lea.vmem %s547, 10 [#allocation3]
        %1388 = vst.msk [vmem:[%s1387] ss:$4 sm:$0x3] %vm855, %v1382
        %s1389 = sand.u32 %s95, 1
        %s1390 = sand.u32 %s95, 1
        %s1391 = smul.addr %s1390, 16
        %s1392 = scalar_lea.vmem [#allocation3], %s1391
        // Predicated region
        $region71: #{_forward_impl.2} parent=65 // pred_check
          %p1393 = pneg %p105
        $region72: #{_forward_impl.2} parent=65 // pred_check_branch
          %1395 = sbr.rel (%p1393) target = $region74
        $region73: #{_forward_impl.2} parent=65 // pred_region
          %s1396 = smul.u32 2, %s14
          %s1397 = smul.addr %s1396, 4
          %s1398 = scalar_lea.vmem %s3, %s1397
          // Predicated region
          $region75: #{_forward_impl.2} parent=73 // pred_check
            _
          $region76: #{_forward_impl.2} parent=73 // pred_check_branch
            %1400 = sbr.rel (0) target = $region78
          $region77: #{_forward_impl.2} parent=73 // pred_region
            // Predicated region
            $region79: #{_forward_impl.2} parent=77 // pred_check
              _
            $region80: #{_forward_impl.2} parent=77 // pred_check_branch
              %1402 = sbr.rel (0) target = $region82
            $region81: #{_forward_impl.2} parent=77 // pred_region
              // Predicated region
              $region94: #{_forward_impl.2} parent=81 // pred_check
                _
              $region95: #{_forward_impl.2} parent=81 // pred_check_branch
                %1419 = sbr.rel (0) target = $region97
              $region96: #{_forward_impl.2} parent=81 // pred_region
                loop: start=0, step=1, limit=1
                $region98: #{_forward_impl.2} parent=96 // loop_pre_header
                  _
                $region99: #{_forward_impl.2} parent=96 // loop_header
                  %s1421 = sphi 0, %s1425
                  %p1422 = scmp.ge.s32.totalorder %s1421, 1
                  %s1426 = sphi %s1392, %s1392
                  %s1427 = sphi %s1398, %s1398
                $region100: #{_forward_impl.2} parent=96 // loop_header_branch
                  %1424 = sbr.rel (%p1422) target = $region104
                $region101: #{_forward_impl.2} parent=96 // loop_body
                  %v1428 = vld [vmem:[%s1426] sm:$0xff]
                  %1429 = vst [vmem:[%s1427] sm:$0xff] %v1428
                  %v1430 = vld [vmem:[%s1426 + $0x8] sm:$0xff]
                  %1431 = vst [vmem:[%s1427 + $0x10] sm:$0xff] %v1430
                $region102: #{_forward_impl.2} parent=96 // loop_footer
                  %s1425 = sadd.s32 1, %s1421
                $region103: #{_forward_impl.2} parent=96 // loop_footer_branch
                  %1420 = sbr.rel target = $region99
                $region104: #{_forward_impl.2} parent=96 // loop_exit
                  _
              $region97: #{_forward_impl.2} parent=81 // pred_fallthru
                _
              // Predicated region
              $region105: #{_forward_impl.2} parent=81 // pred_check
                _
              $region106: #{_forward_impl.2} parent=81 // pred_check_branch
                %1433 = sbr.rel target = $region108
              $region107: #{_forward_impl.2} parent=81 // pred_region
                _
              $region108: #{_forward_impl.2} parent=81 // pred_fallthru
                _
            $region82: #{_forward_impl.2} parent=77 // pred_fallthru
              _
            // Predicated region
            $region83: #{_forward_impl.2} parent=77 // pred_check
              _
            $region84: #{_forward_impl.2} parent=77 // pred_check_branch
              %1404 = sbr.rel target = $region86
            $region85: #{_forward_impl.2} parent=77 // pred_region
              loop: start=0, step=1, limit=1
              $region87: #{_forward_impl.2} parent=85 // loop_pre_header
                _
              $region88: #{_forward_impl.2} parent=85 // loop_header
                %s1407 = sphi 0, %s1411
                %p1408 = scmp.ge.s32.totalorder %s1407, 1
                %s1412 = sphi %s1392, %s1392
                %s1413 = sphi %s1398, %s1398
              $region89: #{_forward_impl.2} parent=85 // loop_header_branch
                %1410 = sbr.rel (%p1408) target = $region93
              $region90: #{_forward_impl.2} parent=85 // loop_body
                %v1414 = vld [vmem:[%s1412] sm:$0xff]
                %1415 = vst [vmem:[%s1413] sm:$0xff] %v1414
                %v1416 = vld [vmem:[%s1412 + $0x8] sm:$0xff]
                %1417 = vst [vmem:[%s1413 + $0x10] sm:$0xff] %v1416
              $region91: #{_forward_impl.2} parent=85 // loop_footer
                %s1411 = sadd.s32 1, %s1407
              $region92: #{_forward_impl.2} parent=85 // loop_footer_branch
                %1406 = sbr.rel target = $region88
              $region93: #{_forward_impl.2} parent=85 // loop_exit
                _
            $region86: #{_forward_impl.2} parent=77 // pred_fallthru
              _
          $region78: #{_forward_impl.2} parent=73 // pred_fallthru
            _
          %1434 = vnop
        $region74: #{_forward_impl.2} parent=65 // pred_fallthru
          _
      $region66: #{_forward_impl.2} parent=5 // pred_fallthru
        _
      %p1435 = scmp.le.s32.totalorder 2, %s9
      // Predicated region
      $region109: #{_forward_impl.2} parent=5 // pred_check
        %p1436 = pneg %p1435
      $region110: #{_forward_impl.2} parent=5 // pred_check_branch
        %1438 = sbr.rel (%p1436) target = $region112
      $region111: #{_forward_impl.2} parent=5 // pred_region
        %s1439 = ssub.s32 %s9, 2
        // Predicated region
        $region113: #{_forward_impl.2} parent=111 // pred_check
          %p1440 = pneg %p111
        $region114: #{_forward_impl.2} parent=111 // pred_check_branch
          %1442 = sbr.rel (%p1440) target = $region116
        $region115: #{_forward_impl.2} parent=111 // pred_region
          %s1443 = sand.u32 %s96, 1
          %s1444 = sand.u32 %s96, 1
          %s1445 = smul.addr %s1444, 16
          %s1446 = scalar_lea.vmem [#allocation3], %s1445
        $region116: #{_forward_impl.2} parent=111 // pred_fallthru
          _
      $region112: #{_forward_impl.2} parent=5 // pred_fallthru
        _
    $region6: #{_forward_impl.2} parent=1 // loop_footer
      %s13 = sadd.s32 1, %s9
    $region7: #{_forward_impl.2} parent=1 // loop_footer_branch
      %8 = sbr.rel target = $region3
    $region8: #{_forward_impl.2} parent=1 // loop_exit
      _

// kernel: _forward_impl.3
$region0: #{_forward_impl.3}
  #allocation0 [shape = 'u32[]', space=smem, size = 0x4, offset = 0x4, fixed_abs, tag = 'smem constant byte address 0x4 - core index']
  #allocation1 [shape = 'u32[144,128]{1,0:T(1,128)}', space=vmem, size = 0x12000, scoped, tag = 'internal scratch']
  %s0 = inlined_call_operand.vmem [shape: f32[2,3,512], index: 0, kind: input, shape index: {}]
  %s1 = inlined_call_operand.vmem [shape: bf16[24,512], index: 1, kind: input, shape index: {}]
  %s2 = inlined_call_operand.vmem [shape: f32[2,16,24], index: 2, kind: input, shape index: {}]
  %s3 = inlined_call_operand.vmem [shape: bf16[512,17], index: 3, kind: input, shape index: {}]
  %s4 = inlined_call_operand.vmem [shape: f32[2,3,512], index: 4, kind: output, shape index: {0}]
  %s5 = inlined_call_operand.vmem [shape: f32[2,3,17], index: 5, kind: output, shape index: {1}]
  %6 = xla_tuple %s4, %s5
  %s7 = sld [smem:[#allocation0]]
  $region99: #{_forward_impl.3} parent=0
    _
  %s9 = ssub.s32 1, %s7
  %s10 = scalar_select 0, %s9, %s7
  $region1: #{_forward_impl.3} parent=0
    #allocation2 [shape = 'u8[24576]{0}', space=vmem, size = 0x6000, scoped, tag = 'input window, operand 1']
    loop: start=0, step=1, limit=6
    $region2: #{_forward_impl.3} parent=1 // loop_pre_header
      _
    $region3: #{_forward_impl.3} parent=1 // loop_header
      %s12 = sphi 0, %s16
      %p13 = scmp.ge.s32.totalorder %s12, 6
      %s19 = sphi 0, %s31
      %s20 = sphi 0, %s27
      %s21 = sphi 0, %s19
      %s22 = sphi 0, %s20
      %s23 = sphi 0, %s21
      %s24 = sphi 0, %s22
      %s36 = sphi 0, %s38
      %s39 = sphi 0, %s36
      %s40 = sphi 0, %s39
      %s56 = sphi 0, %s40
      %s62 = sphi 0, %s64
      %s65 = sphi 0, %s62
      %s66 = sphi 0, %s65
      %s82 = sphi 0, %s66
      %s88 = sphi 0, %s90
      %s91 = sphi 0, %s88
      %s92 = sphi 0, %s91
      %s108 = sphi 0, %s92
      %s114 = sphi 0, %s116
      %s117 = sphi 0, %s114
      %s118 = sphi 0, %s117
      %s134 = sphi 0, %s118
      %s142 = sphi 0, %s144
      %s145 = sphi 0, %s142
      %s146 = sphi 0, %s145
      %s162 = sphi 0, %s146
      %s168 = sphi 0, %s170
      %s171 = sphi 0, %s168
      %s172 = sphi 0, %s171
      %s188 = sphi 0, %s172
    $region4: #{_forward_impl.3} parent=1 // loop_header_branch
      %15 = sbr.rel (%p13) target = $region8
    $region5: #{_forward_impl.3} parent=1 // loop_body
      %s17 = ssub.s32 %s12, 1
      %s18 = ssub.s32 %s12, 2
      %s25 = sadd.s32 1, %s20
      %p26 = scmp.ge.s32.totalorder %s25, 2
      %s27 = scalar_select %p26, 0, %s25
      %s28 = sadd.s32 1, %s19
      %s29 = scalar_select %p26, %s28, %s19
      %p30 = scmp.ge.s32.totalorder %s29, 2
      %s31 = scalar_select %p30, 0, %s29
      %s32 = ssub.s32 %s19, %s31
      %s33 = ssub.s32 %s20, %s27
      %s34 = sor.u32 %s32, %s33
      %p35 = scmp.eq.s32.totalorder %s34, 0
      %s37 = sadd.s32 %s36, 1
      %s38 = scalar_select %p35, %s36, %s37
      %p41 = pneg %p35
      %p42 = scmp.eq.s32.totalorder %s12, 3
      %p43 = por %p41, %p42
      %p44 = scmp.ne.s32.totalorder %s36, %s39
      %p45 = scmp.eq.s32.totalorder %s12, 0
      %p46 = por %p44, %p45
      %p47 = scmp.ne.s32.totalorder %s36, %s39
      %p48 = scmp.eq.s32.totalorder %s17, 3
      %p49 = por %p47, %p48
      %p50 = scmp.ne.s32.totalorder %s39, %s40
      %p51 = scmp.eq.s32.totalorder %s17, 0
      %p52 = por %p50, %p51
      %p53 = scmp.ne.s32.totalorder %s39, %s40
      %p54 = scmp.eq.s32.totalorder %s18, 3
      %p55 = por %p53, %p54
      %p57 = scmp.ne.s32.totalorder %s40, %s56
      %p58 = scmp.eq.s32.totalorder %s18, 0
      %p59 = por %p57, %p58
      %s60 = ssub.s32 %s20, %s27
      %p61 = scmp.eq.s32.totalorder %s60, 0
      %s63 = sadd.s32 %s62, 1
      %s64 = scalar_select %p61, %s62, %s63
      %p67 = pneg %p61
      %p68 = scmp.eq.s32.totalorder %s12, 3
      %p69 = por %p67, %p68
      %p70 = scmp.ne.s32.totalorder %s62, %s65
      %p71 = scmp.eq.s32.totalorder %s12, 0
      %p72 = por %p70, %p71
      %p73 = scmp.ne.s32.totalorder %s62, %s65
      %p74 = scmp.eq.s32.totalorder %s17, 3
      %p75 = por %p73, %p74
      %p76 = scmp.ne.s32.totalorder %s65, %s66
      %p77 = scmp.eq.s32.totalorder %s17, 0
      %p78 = por %p76, %p77
      %p79 = scmp.ne.s32.totalorder %s65, %s66
      %p80 = scmp.eq.s32.totalorder %s18, 3
      %p81 = por %p79, %p80
      %p83 = scmp.ne.s32.totalorder %s66, %s82
      %p84 = scmp.eq.s32.totalorder %s18, 0
      %p85 = por %p83, %p84
      %s86 = ssub.s32 %s19, %s31
      %p87 = scmp.eq.s32.totalorder %s86, 0
      %s89 = sadd.s32 %s88, 1
      %s90 = scalar_select %p87, %s88, %s89
      %p93 = pneg %p87
      %p94 = scmp.eq.s32.totalorder %s12, 3
      %p95 = por %p93, %p94
      %p96 = scmp.ne.s32.totalorder %s88, %s91
      %p97 = scmp.eq.s32.totalorder %s12, 0
      %p98 = por %p96, %p97
      %p99 = scmp.ne.s32.totalorder %s88, %s91
      %p100 = scmp.eq.s32.totalorder %s17, 3
      %p101 = por %p99, %p100
      %p102 = scmp.ne.s32.totalorder %s91, %s92
      %p103 = scmp.eq.s32.totalorder %s17, 0
      %p104 = por %p102, %p103
      %p105 = scmp.ne.s32.totalorder %s91, %s92
      %p106 = scmp.eq.s32.totalorder %s18, 3
      %p107 = por %p105, %p106
      %p109 = scmp.ne.s32.totalorder %s92, %s108
      %p110 = scmp.eq.s32.totalorder %s18, 0
      %p111 = por %p109, %p110
      %s112 = ssub.s32 %s20, %s27
      %p113 = scmp.eq.s32.totalorder %s112, 0
      %s115 = sadd.s32 %s114, 1
      %s116 = scalar_select %p113, %s114, %s115
      %p119 = pneg %p113
      %p120 = scmp.eq.s32.totalorder %s12, 3
      %p121 = por %p119, %p120
      %p122 = scmp.ne.s32.totalorder %s114, %s117
      %p123 = scmp.eq.s32.totalorder %s12, 0
      %p124 = por %p122, %p123
      %p125 = scmp.ne.s32.totalorder %s114, %s117
      %p126 = scmp.eq.s32.totalorder %s17, 3
      %p127 = por %p125, %p126
      %p128 = scmp.ne.s32.totalorder %s117, %s118
      %p129 = scmp.eq.s32.totalorder %s17, 0
      %p130 = por %p128, %p129
      %p131 = scmp.ne.s32.totalorder %s117, %s118
      %p132 = scmp.eq.s32.totalorder %s18, 3
      %p133 = por %p131, %p132
      %p135 = scmp.ne.s32.totalorder %s118, %s134
      %p136 = scmp.eq.s32.totalorder %s18, 0
      %p137 = por %p135, %p136
      %s138 = ssub.s32 %s19, %s31
      %s139 = ssub.s32 %s20, %s27
      %s140 = sor.u32 %s138, %s139
      %p141 = scmp.eq.s32.totalorder %s140, 0
      %s143 = sadd.s32 %s142, 1
      %s144 = scalar_select %p141, %s142, %s143
      %p147 = pneg %p141
      %p148 = scmp.eq.s32.totalorder %s12, 3
      %p149 = por %p147, %p148
      %p150 = scmp.ne.s32.totalorder %s142, %s145
      %p151 = scmp.eq.s32.totalorder %s12, 0
      %p152 = por %p150, %p151
      %p153 = scmp.ne.s32.totalorder %s142, %s145
      %p154 = scmp.eq.s32.totalorder %s17, 3
      %p155 = por %p153, %p154
      %p156 = scmp.ne.s32.totalorder %s145, %s146
      %p157 = scmp.eq.s32.totalorder %s17, 0
      %p158 = por %p156, %p157
      %p159 = scmp.ne.s32.totalorder %s145, %s146
      %p160 = scmp.eq.s32.totalorder %s18, 3
      %p161 = por %p159, %p160
      %p163 = scmp.ne.s32.totalorder %s146, %s162
      %p164 = scmp.eq.s32.totalorder %s18, 0
      %p165 = por %p163, %p164
      %s166 = ssub.s32 %s19, %s31
      %p167 = scmp.eq.s32.totalorder %s166, 0
      %s169 = sadd.s32 %s168, 1
      %s170 = scalar_select %p167, %s168, %s169
      %p173 = pneg %p167
      %p174 = scmp.eq.s32.totalorder %s12, 3
      %p175 = por %p173, %p174
      %p176 = scmp.ne.s32.totalorder %s168, %s171
      %p177 = scmp.eq.s32.totalorder %s12, 0
      %p178 = por %p176, %p177
      %p179 = scmp.ne.s32.totalorder %s168, %s171
      %p180 = scmp.eq.s32.totalorder %s17, 3
      %p181 = por %p179, %p180
      %p182 = scmp.ne.s32.totalorder %s171, %s172
      %p183 = scmp.eq.s32.totalorder %s17, 0
      %p184 = por %p182, %p183
      %p185 = scmp.ne.s32.totalorder %s171, %s172
      %p186 = scmp.eq.s32.totalorder %s18, 3
      %p187 = por %p185, %p186
      %p189 = scmp.ne.s32.totalorder %s172, %s188
      %p190 = scmp.eq.s32.totalorder %s18, 0
      %p191 = por %p189, %p190
      %p192 = scmp.le.s32.totalorder 1, %s12
      %p193 = scmp.lt.s32.totalorder %s12, 5
      %p194 = pnand %p192, %p193
      %p195 = pneg %p194
      // Predicated region
      $region9: #{_forward_impl.3} parent=5 // pred_check
        _
      $region10: #{_forward_impl.3} parent=5 // pred_check_branch
        %197 = sbr.rel (%p194) target = $region12
      $region11: #{_forward_impl.3} parent=5 // pred_region
        %s198 = ssub.s32 %s12, 1
      $region12: #{_forward_impl.3} parent=5 // pred_fallthru
        _
      %p199 = scmp.lt.s32.totalorder %s12, 4
      // Predicated region
      $region13: #{_forward_impl.3} parent=5 // pred_check
        %p200 = pneg %p199
      $region14: #{_forward_impl.3} parent=5 // pred_check_branch
        %202 = sbr.rel (%p200) target = $region16
      $region15: #{_forward_impl.3} parent=5 // pred_region
        // Predicated region
        $region17: #{_forward_impl.3} parent=15 // pred_check
          %p203 = pneg %p46
        $region18: #{_forward_impl.3} parent=15 // pred_check_branch
          %205 = sbr.rel (%p203) target = $region20
        $region19: #{_forward_impl.3} parent=15 // pred_region
          %s206 = smul.u32 2, %s20
          %p207 = scmp.lt.s32.totalorder %s19, 1
          %s208 = scalar_select %p207, %s19, 1
          %p209 = scmp.lt.s32.totalorder %s206, 3
          %s210 = scalar_select %p209, %s206, 3
          %s211 = smul.addr %s208, 4
          %s212 = sadd.s32 %s210, %s211
          %s213 = smul.addr %s212, 4
          %s214 = scalar_lea.vmem %s0, %s213
          %s215 = smul.u32 2, %s20
        $region20: #{_forward_impl.3} parent=15 // pred_fallthru
          _
        // Predicated region
        $region21: #{_forward_impl.3} parent=15 // pred_check
          %p216 = pneg %p72
        $region22: #{_forward_impl.3} parent=15 // pred_check_branch
          %218 = sbr.rel (%p216) target = $region24
        $region23: #{_forward_impl.3} parent=15 // pred_region
          %s219 = sand.u32 %s62, 1
          %s220 = sand.u32 %s62, 1
          %s221 = smul.addr %s220, 24
          %s222 = scalar_lea.vmem [#allocation2], %s221
          %s223 = smul.u32 2, %s20
          %s224 = smul.addr %s223, 4
          %s225 = scalar_lea.vmem %s1, %s224
          // Predicated region
          $region25: #{_forward_impl.3} parent=23 // pred_check
            _
          $region26: #{_forward_impl.3} parent=23 // pred_check_branch
            %227 = sbr.rel (0) target = $region28
          $region27: #{_forward_impl.3} parent=23 // pred_region
            // Predicated region
            $region29: #{_forward_impl.3} parent=27 // pred_check
              _
            $region30: #{_forward_impl.3} parent=27 // pred_check_branch
              %229 = sbr.rel (0) target = $region32
            $region31: #{_forward_impl.3} parent=27 // pred_region
              // Predicated region
              $region44: #{_forward_impl.3} parent=31 // pred_check
                _
              $region45: #{_forward_impl.3} parent=31 // pred_check_branch
                %248 = sbr.rel (0) target = $region47
              $region46: #{_forward_impl.3} parent=31 // pred_region
                loop: start=0, step=1, limit=1
                $region48: #{_forward_impl.3} parent=46 // loop_pre_header
                  _
                $region49: #{_forward_impl.3} parent=46 // loop_header
                  %s250 = sphi 0, %s254
                  %p251 = scmp.ge.s32.totalorder %s250, 1
                  %s255 = sphi %s225, %s225
                  %s256 = sphi %s222, %s222
                $region50: #{_forward_impl.3} parent=46 // loop_header_branch
                  %253 = sbr.rel (%p251) target = $region54
                $region51: #{_forward_impl.3} parent=46 // loop_body
                  %v257 = vld [vmem:[%s255] sm:$0xff]
                  %258 = vst [vmem:[%s256] sm:$0xff] %v257
                  %v259 = vld [vmem:[%s255 + $0x10] sm:$0xff]
                  %260 = vst [vmem:[%s256 + $0x8] sm:$0xff] %v259
                  %v261 = vld [vmem:[%s255 + $0x20] sm:$0xff]
                  %262 = vst [vmem:[%s256 + $0x10] sm:$0xff] %v261
                $region52: #{_forward_impl.3} parent=46 // loop_footer
                  %s254 = sadd.s32 1, %s250
                $region53: #{_forward_impl.3} parent=46 // loop_footer_branch
                  %249 = sbr.rel target = $region49
                $region54: #{_forward_impl.3} parent=46 // loop_exit
                  _
              $region47: #{_forward_impl.3} parent=31 // pred_fallthru
                _
              // Predicated region
              $region55: #{_forward_impl.3} parent=31 // pred_check
                _
              $region56: #{_forward_impl.3} parent=31 // pred_check_branch
                %264 = sbr.rel target = $region58
              $region57: #{_forward_impl.3} parent=31 // pred_region
                _
              $region58: #{_forward_impl.3} parent=31 // pred_fallthru
                _
            $region32: #{_forward_impl.3} parent=27 // pred_fallthru
              _
            // Predicated region
            $region33: #{_forward_impl.3} parent=27 // pred_check
              _
            $region34: #{_forward_impl.3} parent=27 // pred_check_branch
              %231 = sbr.rel target = $region36
            $region35: #{_forward_impl.3} parent=27 // pred_region
              loop: start=0, step=1, limit=1
              $region37: #{_forward_impl.3} parent=35 // loop_pre_header
                _
              $region38: #{_forward_impl.3} parent=35 // loop_header
                %s234 = sphi 0, %s238
                %p235 = scmp.ge.s32.totalorder %s234, 1
                %s239 = sphi %s225, %s225
                %s240 = sphi %s222, %s222
              $region39: #{_forward_impl.3} parent=35 // loop_header_branch
                %237 = sbr.rel (%p235) target = $region43
              $region40: #{_forward_impl.3} parent=35 // loop_body
                %v241 = vld [vmem:[%s239] sm:$0xff]
                %242 = vst [vmem:[%s240] sm:$0xff] %v241
                %v243 = vld [vmem:[%s239 + $0x10] sm:$0xff]
                %244 = vst [vmem:[%s240 + $0x8] sm:$0xff] %v243
                %v245 = vld [vmem:[%s239 + $0x20] sm:$0xff]
                %246 = vst [vmem:[%s240 + $0x10] sm:$0xff] %v245
              $region41: #{_forward_impl.3} parent=35 // loop_footer
                %s238 = sadd.s32 1, %s234
              $region42: #{_forward_impl.3} parent=35 // loop_footer_branch
                %233 = sbr.rel target = $region38
              $region43: #{_forward_impl.3} parent=35 // loop_exit
                _
            $region36: #{_forward_impl.3} parent=27 // pred_fallthru
              _
          $region28: #{_forward_impl.3} parent=23 // pred_fallthru
            _
          %265 = vnop
        $region24: #{_forward_impl.3} parent=15 // pred_fallthru
          _
        // Predicated region
        $region59: #{_forward_impl.3} parent=15 // pred_check
          %p266 = pneg %p98
        $region60: #{_forward_impl.3} parent=15 // pred_check_branch
          %268 = sbr.rel (%p266) target = $region62
        $region61: #{_forward_impl.3} parent=15 // pred_region
          %p269 = scmp.lt.s32.totalorder %s19, 1
          %s270 = scalar_select %p269, %s19, 1
          %s271 = smul.addr %s270, 2
          %s272 = smul.addr %s271, 8
          %s273 = scalar_lea.vmem %s2, %s272
        $region62: #{_forward_impl.3} parent=15 // pred_fallthru
          _
        // Predicated region
        $region63: #{_forward_impl.3} parent=15 // pred_check
          %p274 = pneg %p124
        $region64: #{_forward_impl.3} parent=15 // pred_check_branch
          %276 = sbr.rel (%p274) target = $region66
        $region65: #{_forward_impl.3} parent=15 // pred_region
          %s277 = smul.u32 32, %s20
          %p278 = scmp.lt.s32.totalorder %s277, 63
          %s279 = scalar_select %p278, %s277, 63
          %s280 = smul.addr %s279, 4
          %s281 = scalar_lea.vmem %s3, %s280
          %s282 = smul.u32 32, %s20
        $region66: #{_forward_impl.3} parent=15 // pred_fallthru
          _
      $region16: #{_forward_impl.3} parent=5 // pred_fallthru
        _
      %p283 = scmp.le.s32.totalorder 1, %s12
      %p284 = scmp.lt.s32.totalorder %s12, 5
      %p285 = pnand %p283, %p284
      %p286 = pneg %p285
      // Predicated region
      $region67: #{_forward_impl.3} parent=5 // pred_check
        _
      $region68: #{_forward_impl.3} parent=5 // pred_check_branch
        %288 = sbr.rel (%p285) target = $region70
      $region69: #{_forward_impl.3} parent=5 // pred_region
        %s289 = ssub.s32 %s12, 1
        %s290 = sand.u32 %s65, 1
        %s291 = sand.u32 %s65, 1
        %s292 = smul.addr %s291, 24
        %s293 = scalar_lea.vmem [#allocation2], %s292
        // Predicated region
        $region71: #{_forward_impl.3} parent=69 // pred_check
          %p294 = pneg %p78
        $region72: #{_forward_impl.3} parent=69 // pred_check_branch
          %296 = sbr.rel (%p294) target = $region74
        $region73: #{_forward_impl.3} parent=69 // pred_region
          _
        $region74: #{_forward_impl.3} parent=69 // pred_fallthru
          _
        %s297 = smul.u32 2, %s22
        %p298 = scmp.lt.s32.totalorder %s21, 1
        %s299 = scalar_select %p298, %s21, 1
        %p300 = scmp.lt.s32.totalorder %s297, 3
        %s301 = scalar_select %p300, %s297, 3
        %s302 = smul.addr %s299, 4
        %s303 = sadd.s32 %s301, %s302
        %s304 = smul.addr %s303, 4
        %s305 = scalar_lea.vmem %s0, %s304
        %p306 = pneg %p52
        %p307 = pneg %p49
        %s308 = sand.u32 %s65, 1
        %s309 = sand.u32 %s65, 1
        %s310 = smul.addr %s309, 24
        %s311 = scalar_lea.vmem [#allocation2], %s310
        %p312 = pneg %p78
        %p313 = pneg %p75
        %p314 = scmp.lt.s32.totalorder %s21, 1
        %s315 = scalar_select %p314, %s21, 1
        %s316 = smul.addr %s315, 2
        %s317 = smul.addr %s316, 8
        %s318 = scalar_lea.vmem %s2, %s317
        %p319 = pneg %p104
        %p320 = pneg %p101
        %s321 = smul.u32 32, %s22
        %p322 = scmp.lt.s32.totalorder %s321, 63
        %s323 = scalar_select %p322, %s321, 63
        %s324 = smul.addr %s323, 4
        %s325 = scalar_lea.vmem %s3, %s324
        %p326 = pneg %p130
        %p327 = pneg %p127
        %p328 = pneg %p158
        %p329 = pneg %p155
        %s330 = smul.u32 2, %s22
        %p331 = scmp.lt.s32.totalorder %s21, 1
        %s332 = scalar_select %p331, %s21, 1
        %p333 = scmp.lt.s32.totalorder %s330, 3
        %s334 = scalar_select %p333, %s330, 3
        %s335 = smul.addr %s332, 4
        %s336 = sadd.s32 %s334, %s335
        %s337 = smul.addr %s336, 4
        %s338 = scalar_lea.vmem %s4, %s337
        %p339 = pneg %p184
        %p340 = pneg %p181
        %p341 = scmp.lt.s32.totalorder %s21, 1
        %s342 = scalar_select %p341, %s21, 1
        %s343 = smul.addr %s342, 4
        %s344 = scalar_lea.vmem %s5, %s343
        %s345 = smul.u32 2, %s22
        %p346 = scmp.lt.s32.totalorder %s21, 1
        %s347 = scalar_select %p346, %s21, 1
        %p348 = scmp.lt.s32.totalorder %s345, 3
        %s349 = scalar_select %p348, %s345, 3
        %s350 = smul.addr %s347, 4
        %s351 = sadd.s32 %s349, %s350
        %s352 = smul.addr %s351, 4
        %s353 = scalar_lea.vmem %s0, %s352
        %s354 = smul.u32 2, %s22
        %s355 = smul.u32 2, %s22
        %p356 = scmp.lt.s32.totalorder %s21, 1
        %s357 = scalar_select %p356, %s21, 1
        %s358 = smul.addr %s357, 2
        %s359 = smul.addr %s358, 8
        %s360 = scalar_lea.vmem %s2, %s359
        %s361 = smul.u32 32, %s22
        %p362 = scmp.lt.s32.totalorder %s361, 63
        %s363 = scalar_select %p362, %s361, 63
        %s364 = smul.addr %s363, 4
        %s365 = scalar_lea.vmem %s3, %s364
        %s366 = smul.u32 32, %s22
        %s367 = smul.u32 2, %s22
        %p368 = scmp.lt.s32.totalorder %s21, 1
        %s369 = scalar_select %p368, %s21, 1
        %p370 = scmp.lt.s32.totalorder %s367, 3
        %s371 = scalar_select %p370, %s367, 3
        %s372 = smul.addr %s369, 4
        %s373 = sadd.s32 %s371, %s372
        %s374 = smul.addr %s373, 4
        %s375 = scalar_lea.vmem %s4, %s374
        %s376 = smul.u32 2, %s22
        %p377 = scmp.lt.s32.totalorder %s21, 1
        %s378 = scalar_select %p377, %s21, 1
        %s379 = smul.addr %s378, 4
        %s380 = scalar_lea.vmem %s5, %s379
        %v381 = vld [vmem:[%s360] sm:$0xff]
        %v382 = vld [vmem:[%s360 + $0x8] sm:$0xff]
        %v383 = vld [vmem:[%s293] sm:$0xff]
        %v384 = vld [vmem:[%s293 + $0x8] sm:$0xff]
        %v385 = vld [vmem:[%s293 + $0x10] sm:$0xff]
        %v386 = vunpack.c.l.bf16 %v383
        %v387 = vunpack.c.h.bf16 %v383
        %v388 = vunpack.c.l.bf16 %v384
        %v389 = vunpack.c.h.bf16 %v384
        %v390 = vunpack.c.l.bf16 %v385
        %v391 = vunpack.c.h.bf16 %v385
        %vm392 = vcmask 195584
        %v394 = vsel %vm392, %v381, 0
        %v397 = vsel %vm392, %v382, 0
        %399 = vmatprep.subr.mxu0 %v387
        %400 = vmatpush1.msra.mxu0 %v386
        %401 = vmatprep.subr.mxu0 %v389
        %402 = vmatpush1.msra.mxu0 %v388
        %403 = vmatprep.subr.mxu0 %v391
        %404 = vmatpush1.msra.mxu0 %v390
        %405 = vmatprep.subr.mxu0 0.0
        %406 = vmatpush1.msra.mxu0 0.0
        %407 = vmatprep.subr.mxu0 0.0
        %408 = vmatpush1.msra.mxu0 0.0
        %409 = vmatprep.subr.mxu0 0.0
        %410 = vmatpush1.msra.mxu0 0.0
        %411 = vmatprep.subr.mxu0 0.0
        %412 = vmatpush1.msra.mxu0 0.0
        %413 = vmatprep.subr.mxu0 0.0
        %414 = vmatpush1.msra.mxu0 0.0
        %415 = vmatprep.subr.mxu0 0.0
        %416 = vmatpush1.msra.mxu0 0.0
        %417 = vmatprep.subr.mxu0 0.0
        %418 = vmatpush1.msra.mxu0 0.0
        %419 = vmatprep.subr.mxu0 0.0
        %420 = vmatpush1.msra.mxu0 0.0
        %421 = vmatprep.subr.mxu0 0.0
        %422 = vmatpush1.msra.mxu0 0.0
        %423 = vmatprep.subr.mxu0 0.0
        %424 = vmatpush1.msra.mxu0 0.0
        %425 = vmatprep.subr.mxu0 0.0
        %426 = vmatpush1.msra.mxu0 0.0
        %427 = vmatprep.subr.mxu0 0.0
        %428 = vmatpush1.msra.mxu0 0.0
        %429 = vmatprep.subr.mxu0 0.0
        %430 = vmatpush1.msra.mxu0 0.0
        %431 = vmatprep.subr.mxu0 0.0
        %432 = vmatpush1.msra.mxu0 0.0
        %433 = vmatprep.subr.mxu0 0.0
        %434 = vmatpush1.msra.mxu0 0.0
        %435 = vmatprep.subr.mxu0 0.0
        %436 = vmatpush1.msra.mxu0 0.0
        %437 = vmatprep.subr.mxu0 0.0
        %438 = vmatpush1.msra.mxu0 0.0
        %439 = vmatprep.subr.mxu0 0.0
        %440 = vmatpush1.msra.mxu0 0.0
        %441 = vmatprep.subr.mxu0 0.0
        %442 = vmatpush1.msra.mxu0 0.0
        %443 = vmatprep.subr.mxu0 0.0
        %444 = vmatpush1.msra.mxu0 0.0
        %445 = vmatprep.subr.mxu0 0.0
        %446 = vmatpush1.msra.mxu0 0.0
        %447 = vmatprep.subr.mxu0 0.0
        %448 = vmatpush1.msra.mxu0 0.0
        %449 = vmatprep.subr.mxu0 0.0
        %450 = vmatpush1.msra.mxu0 0.0
        %451 = vmatprep.subr.mxu0 0.0
        %452 = vmatpush1.msra.mxu0 0.0
        %453 = vmatprep.subr.mxu0 0.0
        %454 = vmatpush1.msra.mxu0 0.0
        %455 = vmatprep.subr.mxu0 0.0
        %456 = vmatpush1.msra.mxu0 0.0
        %457 = vmatprep.subr.mxu0 0.0
        %458 = vmatpush1.msra.mxu0 0.0
        %459 = vmatprep.subr.mxu0 0.0
        %460 = vmatpush1.msra.mxu0 0.0
        %461 = vmatprep.subr.mxu0 0.0
        %462 = vmatpush1.msra.mxu0 0.0
        %463 = vmatprep.mubr.f32.mxu0 0.0
        %464 = vmatmul.mubr.f32.gmra.mrb[0].mxu0 %v394
        %v465 = vpop.f32.mrb[0].mxu0
        %v466 = vadd.f32 0.0, %v465
        %v467 = vpop.f32.mrb[0].mxu0
        %v468 = vadd.f32 0.0, %v467
        %469 = vmatprep.mubr.f32.mxu0 0.0
        %470 = vmatmul.mubr.f32.gmra.mrb[0].mxu0 %v397
        %v471 = vpop.f32.mrb[0].mxu0
        %v472 = vadd.f32 0.0, %v471
        %v473 = vpop.f32.mrb[0].mxu0
        %v474 = vadd.f32 0.0, %v473
        %475 = vdwg.mxu0
        %v476 = vld [vmem:[%s353] sm:$0x77]
        %v478 = vlaneseq
        %v479 = vshrl.u32 %v478, 7
        %v480 = vsub.s32 0, %v479
        %v481 = vrot.slane %v476, %v480
        %v482 = vlaneseq
        %v483 = vshrl.u32 %v482, 7
        %v484 = vsub.s32 4, %v483
        %v485 = vrot.slane %v476, %v484
        %v488 = vmul.f32 %v466, %v481
        %v489 = vmul.f32 %v468, %v485
        %v490 = vlaneseq
        %v491 = vshrl.u32 %v490, 7
        %v492 = vsub.s32 1, %v491
        %v493 = vrot.slane %v476, %v492
        %v494 = vlaneseq
        %v495 = vshrl.u32 %v494, 7
        %v496 = vsub.s32 5, %v495
        %v497 = vrot.slane %v476, %v496
        %v500 = vmul.f32 %v466, %v493
        %v501 = vmul.f32 %v468, %v497
        %v504 = vrot.slane %v500, 1
        %v505 = vrot.slane %v501, 1
        %v508 = vadd.f32 %v488, %v504
        %v509 = vadd.f32 %v489, %v505
        %v510 = vlaneseq
        %v511 = vshrl.u32 %v510, 7
        %v512 = vsub.s32 2, %v511
        %v513 = vrot.slane %v476, %v512
        %v514 = vlaneseq
        %v515 = vshrl.u32 %v514, 7
        %v516 = vsub.s32 6, %v515
        %v517 = vrot.slane %v476, %v516
        %v520 = vmul.f32 %v466, %v513
        %v521 = vmul.f32 %v468, %v517
        %v524 = vrot.slane %v520, 2
        %v525 = vrot.slane %v521, 2
        %v528 = vadd.f32 %v508, %v524
        %v529 = vadd.f32 %v509, %v525
        %v532 = vrot.slane %v466, 3
        %v533 = vrot.slane %v468, 3
        %v536 = vadd.f32 %v528, %v532
        %v537 = vadd.f32 %v529, %v533
        %v538 = vmul.f32 %v472, %v481
        %v539 = vmul.f32 %v474, %v485
        %v540 = vmul.f32 %v472, %v493
        %v541 = vmul.f32 %v474, %v497
        %v544 = vrot.slane %v540, 1
        %v545 = vrot.slane %v541, 1
        %v548 = vadd.f32 %v538, %v544
        %v549 = vadd.f32 %v539, %v545
        %v550 = vmul.f32 %v472, %v513
        %v551 = vmul.f32 %v474, %v517
        %v554 = vrot.slane %v550, 2
        %v555 = vrot.slane %v551, 2
        %v558 = vadd.f32 %v548, %v554
        %v559 = vadd.f32 %v549, %v555
        %v562 = vrot.slane %v472, 3
        %v563 = vrot.slane %v474, 3
        %v566 = vadd.f32 %v558, %v562
        %v567 = vadd.f32 %v559, %v563
        %v570 = vrot.slane %v536, 3
        %v571 = vrot.slane %v537, 3
        %v576 = vrot.slane %v566, 6
        %v577 = vrot.slane %v567, 6
        %vm580 = vcmask 1040384
        %v581 = vsel %vm580, %v536, %v570
        %v582 = vsel %vm580, %v537, %v571
        %vm583 = vcmask 1041408
        %v584 = vsel %vm583, %v581, %v576
        %v585 = vsel %vm583, %v582, %v577
        %v588 = vcombine.low %v584, %v585
        %590 = vst [vmem:[%s375] sm:$0x77] %v588
        %v591 = vld [vmem:[%s365] sm:$0xf]
        %v592 = vld [vmem:[%s365 + $0x4] sm:$0xf]
        %v593 = vld [vmem:[%s365 + $0x8] sm:$0xf]
        %v594 = vld [vmem:[%s365 + $0xc] sm:$0xf]
        %v595 = vld [vmem:[%s365 + $0x10] sm:$0xf]
        %v596 = vld [vmem:[%s365 + $0x14] sm:$0xf]
        %v597 = vld [vmem:[%s365 + $0x18] sm:$0xf]
        %v598 = vld [vmem:[%s365 + $0x1c] sm:$0xf]
        %v599 = vld [vmem:[%s365 + $0x20] sm:$0xf]
        %v600 = vld [vmem:[%s365 + $0x24] sm:$0xf]
        %v601 = vld [vmem:[%s365 + $0x28] sm:$0xf]
        %v602 = vld [vmem:[%s365 + $0x2c] sm:$0xf]
        %v603 = vld [vmem:[%s365 + $0x30] sm:$0xf]
        %v604 = vld [vmem:[%s365 + $0x34] sm:$0xf]
        %v605 = vld [vmem:[%s365 + $0x38] sm:$0xf]
        %v606 = vld [vmem:[%s365 + $0x3c] sm:$0xf]
        %v607 = vld [vmem:[%s365 + $0x40] sm:$0xf]
        %v608 = vld [vmem:[%s365 + $0x44] sm:$0xf]
        %v609 = vld [vmem:[%s365 + $0x48] sm:$0xf]
        %v610 = vld [vmem:[%s365 + $0x4c] sm:$0xf]
        %v611 = vld [vmem:[%s365 + $0x50] sm:$0xf]
        %v612 = vld [vmem:[%s365 + $0x54] sm:$0xf]
        %v613 = vld [vmem:[%s365 + $0x58] sm:$0xf]
        %v614 = vld [vmem:[%s365 + $0x5c] sm:$0xf]
        %v615 = vld [vmem:[%s365 + $0x60] sm:$0xf]
        %v616 = vld [vmem:[%s365 + $0x64] sm:$0xf]
        %v617 = vld [vmem:[%s365 + $0x68] sm:$0xf]
        %v618 = vld [vmem:[%s365 + $0x6c] sm:$0xf]
        %v619 = vld [vmem:[%s365 + $0x70] sm:$0xf]
        %v620 = vld [vmem:[%s365 + $0x74] sm:$0xf]
        %v621 = vld [vmem:[%s365 + $0x78] sm:$0xf]
        %v622 = vld [vmem:[%s365 + $0x7c] sm:$0xf]
        %v623 = vunpack.c.l.bf16 %v591
        %v624 = vunpack.c.l.bf16 %v592
        %v625 = vunpack.c.l.bf16 %v593
        %v626 = vunpack.c.l.bf16 %v594
        %v627 = vunpack.c.l.bf16 %v595
        %v628 = vunpack.c.l.bf16 %v596
        %v629 = vunpack.c.l.bf16 %v597
        %v630 = vunpack.c.l.bf16 %v598
        %v631 = vunpack.c.l.bf16 %v599
        %v632 = vunpack.c.l.bf16 %v600
        %v633 = vunpack.c.l.bf16 %v601
        %v634 = vunpack.c.l.bf16 %v602
        %v635 = vunpack.c.l.bf16 %v603
        %v636 = vunpack.c.l.bf16 %v604
        %v637 = vunpack.c.l.bf16 %v605
        %v638 = vunpack.c.l.bf16 %v606
        %v639 = vunpack.c.l.bf16 %v607
        %v640 = vunpack.c.l.bf16 %v608
        %v641 = vunpack.c.l.bf16 %v609
        %v642 = vunpack.c.l.bf16 %v610
        %v643 = vunpack.c.l.bf16 %v611
        %v644 = vunpack.c.l.bf16 %v612
        %v645 = vunpack.c.l.bf16 %v613
        %v646 = vunpack.c.l.bf16 %v614
        %v647 = vunpack.c.l.bf16 %v615
        %v648 = vunpack.c.l.bf16 %v616
        %v649 = vunpack.c.l.bf16 %v617
        %v650 = vunpack.c.l.bf16 %v618
        %v651 = vunpack.c.l.bf16 %v619
        %v652 = vunpack.c.l.bf16 %v620
        %v653 = vunpack.c.l.bf16 %v621
        %v654 = vunpack.c.l.bf16 %v622
        %655 = vmatprep.subr.mxu0 0.0
        %656 = vmatpush1.msra.mxu0 %v623
        %657 = vmatprep.subr.mxu0 0.0
        %658 = vmatpush1.msra.mxu0 %v624
        %659 = vmatprep.subr.mxu0 0.0
        %660 = vmatpush1.msra.mxu0 %v625
        %661 = vmatprep.subr.mxu0 0.0
        %662 = vmatpush1.msra.mxu0 %v626
        %663 = vmatprep.subr.mxu0 0.0
        %664 = vmatpush1.msra.mxu0 %v627
        %665 = vmatprep.subr.mxu0 0.0
        %666 = vmatpush1.msra.mxu0 %v628
        %667 = vmatprep.subr.mxu0 0.0
        %668 = vmatpush1.msra.mxu0 %v629
        %669 = vmatprep.subr.mxu0 0.0
        %670 = vmatpush1.msra.mxu0 %v630
        %671 = vmatprep.subr.mxu0 0.0
        %672 = vmatpush1.msra.mxu0 %v631
        %673 = vmatprep.subr.mxu0 0.0
        %674 = vmatpush1.msra.mxu0 %v632
        %675 = vmatprep.subr.mxu0 0.0
        %676 = vmatpush1.msra.mxu0 %v633
        %677 = vmatprep.subr.mxu0 0.0
        %678 = vmatpush1.msra.mxu0 %v634
        %679 = vmatprep.subr.mxu0 0.0
        %680 = vmatpush1.msra.mxu0 %v635
        %681 = vmatprep.subr.mxu0 0.0
        %682 = vmatpush1.msra.mxu0 %v636
        %683 = vmatprep.subr.mxu0 0.0
        %684 = vmatpush1.msra.mxu0 %v637
        %685 = vmatprep.subr.mxu0 0.0
        %686 = vmatpush1.msra.mxu0 %v638
        %687 = vmatprep.subr.mxu0 0.0
        %688 = vmatpush1.msra.mxu0 %v639
        %689 = vmatprep.subr.mxu0 0.0
        %690 = vmatpush1.msra.mxu0 %v640
        %691 = vmatprep.subr.mxu0 0.0
        %692 = vmatpush1.msra.mxu0 %v641
        %693 = vmatprep.subr.mxu0 0.0
        %694 = vmatpush1.msra.mxu0 %v642
        %695 = vmatprep.subr.mxu0 0.0
        %696 = vmatpush1.msra.mxu0 %v643
        %697 = vmatprep.subr.mxu0 0.0
        %698 = vmatpush1.msra.mxu0 %v644
        %699 = vmatprep.subr.mxu0 0.0
        %700 = vmatpush1.msra.mxu0 %v645
        %701 = vmatprep.subr.mxu0 0.0
        %702 = vmatpush1.msra.mxu0 %v646
        %703 = vmatprep.subr.mxu0 0.0
        %704 = vmatpush1.msra.mxu0 %v647
        %705 = vmatprep.subr.mxu0 0.0
        %706 = vmatpush1.msra.mxu0 %v648
        %707 = vmatprep.subr.mxu0 0.0
        %708 = vmatpush1.msra.mxu0 %v649
        %709 = vmatprep.subr.mxu0 0.0
        %710 = vmatpush1.msra.mxu0 %v650
        %711 = vmatprep.subr.mxu0 0.0
        %712 = vmatpush1.msra.mxu0 %v651
        %713 = vmatprep.subr.mxu0 0.0
        %714 = vmatpush1.msra.mxu0 %v652
        %715 = vmatprep.subr.mxu0 0.0
        %716 = vmatpush1.msra.mxu0 %v653
        %717 = vmatprep.subr.mxu0 0.0
        %718 = vmatpush1.msra.mxu0 %v654
        %719 = vmatprep.mubr.f32.mxu0 %v585
        %720 = vmatmul.mubr.f32.gmra.mrb[0].mxu0 %v584
        %v721 = vpop.f32.mrb[0].mxu0
        %v722 = vadd.f32 0.0, %v721
        %v723 = vpop.f32.mrb[0].mxu0
        %724 = vdwg.mxu0
        %p725 = scmp.eq.s32.totalorder %s22, 0
        // Predicated region
        $region75: #{_forward_impl.3} parent=69 // pred_check
          %p726 = pneg %p725
        $region76: #{_forward_impl.3} parent=69 // pred_check_branch
          %728 = sbr.rel (%p726) target = $region78
        $region77: #{_forward_impl.3} parent=69 // pred_region
          %vm729 = vcmask 133120
          %730 = vst.msk [vmem:[%s380] sm:$0x7] %vm729, 0.0
        $region78: #{_forward_impl.3} parent=69 // pred_fallthru
          _
        %v731 = vld [vmem:[%s380] sm:$0x7]
        %v732 = vadd.f32 %v731, %v722
        %vm733 = vcmask 133120
        %734 = vst.msk [vmem:[%s380] sm:$0x7] %vm733, %v732
        %s735 = smul.u32 2, %s22
        %p736 = scmp.lt.s32.totalorder %s21, 1
        %s737 = scalar_select %p736, %s21, 1
        %p738 = scmp.lt.s32.totalorder %s735, 3
        %s739 = scalar_select %p738, %s735, 3
        %s740 = smul.addr %s737, 4
        %s741 = sadd.s32 %s739, %s740
        %s742 = smul.addr %s741, 4
        %s743 = scalar_lea.vmem %s4, %s742
        %p744 = scmp.lt.s32.totalorder %s21, 1
        %s745 = scalar_select %p744, %s21, 1
        %s746 = smul.addr %s745, 4
        %s747 = scalar_lea.vmem %s5, %s746
        // Predicated region
        $region79: #{_forward_impl.3} parent=69 // pred_check
          %p748 = pneg %p155
        $region80: #{_forward_impl.3} parent=69 // pred_check_branch
          %750 = sbr.rel (%p748) target = $region82
        $region81: #{_forward_impl.3} parent=69 // pred_region
          %s751 = smul.u32 2, %s22
        $region82: #{_forward_impl.3} parent=69 // pred_fallthru
          _
        // Predicated region
        $region83: #{_forward_impl.3} parent=69 // pred_check
          %p752 = pneg %p181
        $region84: #{_forward_impl.3} parent=69 // pred_check_branch
          %754 = sbr.rel (%p752) target = $region86
        $region85: #{_forward_impl.3} parent=69 // pred_region
          _
        $region86: #{_forward_impl.3} parent=69 // pred_fallthru
          _
      $region70: #{_forward_impl.3} parent=5 // pred_fallthru
        _
      %p755 = scmp.le.s32.totalorder 2, %s12
      // Predicated region
      $region87: #{_forward_impl.3} parent=5 // pred_check
        %p756 = pneg %p755
      $region88: #{_forward_impl.3} parent=5 // pred_check_branch
        %758 = sbr.rel (%p756) target = $region90
      $region89: #{_forward_impl.3} parent=5 // pred_region
        %s759 = ssub.s32 %s12, 2
        // Predicated region
        $region91: #{_forward_impl.3} parent=89 // pred_check
          %p760 = pneg %p161
        $region92: #{_forward_impl.3} parent=89 // pred_check_branch
          %762 = sbr.rel (%p760) target = $region94
        $region93: #{_forward_impl.3} parent=89 // pred_region
          %s763 = smul.u32 2, %s24
          %p764 = scmp.lt.s32.totalorder %s23, 1
          %s765 = scalar_select %p764, %s23, 1
          %p766 = scmp.lt.s32.totalorder %s763, 3
          %s767 = scalar_select %p766, %s763, 3
          %s768 = smul.addr %s765, 4
          %s769 = sadd.s32 %s767, %s768
          %s770 = smul.addr %s769, 4
          %s771 = scalar_lea.vmem %s4, %s770
        $region94: #{_forward_impl.3} parent=89 // pred_fallthru
          _
        // Predicated region
        $region95: #{_forward_impl.3} parent=89 // pred_check
          %p772 = pneg %p187
        $region96: #{_forward_impl.3} parent=89 // pred_check_branch
          %774 = sbr.rel (%p772) target = $region98
        $region97: #{_forward_impl.3} parent=89 // pred_region
          %p775 = scmp.lt.s32.totalorder %s23, 1
          %s776 = scalar_select %p775, %s23, 1
          %s777 = smul.addr %s776, 4
          %s778 = scalar_lea.vmem %s5, %s777
        $region98: #{_forward_impl.3} parent=89 // pred_fallthru
          _
      $region90: #{_forward_impl.3} parent=5 // pred_fallthru
        _
    $region6: #{_forward_impl.3} parent=1 // loop_footer
      %s16 = sadd.s32 1, %s12
    $region7: #{_forward_impl.3} parent=1 // loop_footer_branch
      %11 = sbr.rel target = $region3
    $region8: #{_forward_impl.3} parent=1 // loop_exit
      _

</llo_original>
